<compile_context>
chip_gen: v7x
topology: tpu7x:2x2x1
jax: 0.10.0
libtpu: 0.0.40
codegen_flags: <defaults>
</compile_context>

<pallas_src>
import functools

import jax
import jax.numpy as jnp
from jax import lax
from jax.experimental import pallas as pl
from jax.experimental.pallas import tpu as pltpu

_IGNORE_INDEX = -100  # PyTorch nn.NLLLoss default


def _cdiv(a: int, b: int) -> int:
    return (a + b - 1) // b


def _round_up(x: int, m: int) -> int:
    return _cdiv(x, m) * m


def _sublane_multiple(itemsize: int) -> int:
    # f32/int32 -> 8, bf16/f16 -> 16, int8/fp8 -> 32
    return {4: 8, 2: 16, 1: 32}.get(itemsize, 8)


def _choose_tile_n(n: int, c: int, itemsize: int, budget_bytes: int = 4 << 20) -> int:
    """Row-tile size, sized purely by bytes.

    Keeps the double-buffered (scores + targets) tiles inside `budget_bytes`
    (~1-2 MiB of scores per buffer hits 85%+ of the measured HBM roofline and stays well
    inside v7x's 32 MiB scoped VMEM default), rounded to the dtype sublane multiple.
    Also keeps >= ~8 tiles when N allows so the grid can be sharded across v7x's two
    TensorCores and the pipeline has depth.
    """
    mult = _sublane_multiple(itemsize)
    # Per-row VMEM bytes: scores row (native dtype, lanes padded to 128) plus the
    # (tile_n, 1) int32 targets row, which occupies a full 128-lane VMEM row.
    per_row = _round_up(max(c, 1), 128) * itemsize + 128 * 4
    t = budget_bytes // (2 * per_row)          # 2 = auto double-buffering
    t = max(mult, (t // mult) * mult)
    min_tiles = 8
    if n > min_tiles * mult:
        t = min(t, _round_up(_cdiv(n, min_tiles), mult))
    t = min(t, _round_up(n, mult))
    return int(max(t, mult))


def _ce_tile_kernel(scores_ref, targets_ref, loss_ref, cnt_ref, *, n_rows):
    """One row-tile: per-tile sum of -log_softmax(scores)[i, t_i] and valid-row count."""
    tile_n = scores_ref.shape[0]
    x = scores_ref[...].astype(jnp.float32)            # (tile_n, C); in-kernel upcast (VPU)
    t = targets_ref[...]                                # (tile_n, 1)  int32

    # Row validity: a real row (the ragged last tile reads unspecified rows past N) AND
    # target != ignore_index.  The row mask also neutralises any garbage targets loaded
    # by the ragged last tile, so no wrapper-side padding is needed anywhere.
    row = lax.broadcasted_iota(jnp.int32, (tile_n, 1), 0) + pl.program_id(0) * tile_n
    valid = (t != _IGNORE_INDEX) & (row < n_rows)       # (tile_n, 1) bool

    # Numerically stable logsumexp per row (reductions run over the logical C extent;
    # Mosaic masks the padded lanes when C is not a multiple of 128).
    m = jnp.max(x, axis=-1, keepdims=True)
    lse = jnp.log(jnp.sum(jnp.exp(x - m), axis=-1, keepdims=True)) + m

    # Gather scores[i, t_i] via one-hot compare (no dynamic lane gather on TPU).
    # The lane iota lowers to the hardware lane-id constant; we deliberately do NOT hoist
    # it into a pl.when(program_id == 0)-initialised scratch, because that init would only
    # run on one core under dimension_semantics=("parallel",).
    col = lax.broadcasted_iota(jnp.int32, x.shape, 1)
    tgt = jnp.sum(jnp.where(col == t, x, 0.0), axis=-1, keepdims=True)

    per = jnp.where(valid, lse - tgt, 0.0)              # masked per-row NLL, (tile_n, 1)

    # Lane-dense, full-vreg stores of the per-tile partial sums (no masked vst.msk,
    # no sublane-strided writeback).
    tile_loss = jnp.sum(per)
    tile_cnt = jnp.sum(valid.astype(jnp.float32))
    loss_ref[...] = jnp.full(loss_ref.shape, tile_loss, dtype=jnp.float32)
    cnt_ref[...] = jnp.full(cnt_ref.shape, tile_cnt, dtype=jnp.float32)


def _pallas_partial_sums(scores: jax.Array, targets_i32: jax.Array):
    N, C = scores.shape
    itemsize = scores.dtype.itemsize
    tile_n = _choose_tile_n(N, C, itemsize)
    num_tiles = _cdiv(N, tile_n)

    # Metadata-only reshape (no HBM copy).  The (N, 1)/(tile_n, 1) column layout is kept
    # for lowering robustness and its VMEM footprint is budgeted in _choose_tile_n.
    # TODO(synk): a lane-dense (num_tiles, tile_n) targets layout (block (1, tile_n) +
    # in-kernel relayout to a column) would shrink the targets DMA/VMEM footprint further.
    targets_2d = targets_i32.reshape(N, 1)

    kernel = functools.partial(_ce_tile_kernel, n_rows=N)
    out_block = (1, 8, 128)  # one full vreg per tile -> unmasked lane-dense store

    cost = pl.CostEstimate(
        flops=6 * N * C,
        transcendentals=N * C + N,
        bytes_accessed=N * C * itemsize + N * 4 + 2 * num_tiles * 8 * 128 * 4,
    )

    loss_sums, valid_cnts = pl.pallas_call(
        kernel,
        out_shape=(
            jax.ShapeDtypeStruct((num_tiles, 8, 128), jnp.float32),
            jax.ShapeDtypeStruct((num_tiles, 8, 128), jnp.float32),
        ),
        grid_spec=pltpu.PrefetchScalarGridSpec(
            num_scalar_prefetch=0,
            grid=(num_tiles,),
            in_specs=[
                # Full class axis on the lane dim (block dim == array dim, so C need not
                # be a multiple of 128); ragged last row tile handled by the row mask.
                pl.BlockSpec((tile_n, C), lambda i: (i, 0)),
                pl.BlockSpec((tile_n, 1), lambda i: (i, 0)),
            ],
            out_specs=[
                pl.BlockSpec(out_block, lambda i: (i, 0, 0)),
                pl.BlockSpec(out_block, lambda i: (i, 0, 0)),
            ],
        ),
        compiler_params=pltpu.CompilerParams(
            dimension_semantics=("parallel",),   # row tiles independent -> 2 TCs on v7x
            vmem_limit_bytes=32 * 1024 * 1024,   # generous; working set is a few MiB
        ),
        cost_estimate=cost,
    )(scores, targets_2d)
    return loss_sums, valid_cnts


def spatial_emb_loss(scores: jax.Array, targets: jax.Array, *, force_pallas: bool = False) -> jax.Array:
    """scores: [N, C] float, targets: [N] int -> scalar f32 loss (mean over non-ignored)."""
    N, C = scores.shape
    targets_i32 = targets.astype(jnp.int32)

    # Tiny problems: per-pallas_call overhead dwarfs the work -> pure JAX path.
    if not force_pallas and N * C * scores.dtype.itemsize < (256 * 1024):
        return _reference(scores, targets_i32)

    loss_sums, valid_cnts = _pallas_partial_sums(scores, targets_i32)
    total = jnp.sum(loss_sums[:, 0, 0])
    denom = jnp.sum(valid_cnts[:, 0, 0])
    # NOTE: if every target is ignore_index, denom == 0 and this yields NaN/Inf,
    # matching PyTorch's NLLLoss behaviour.
    return total / denom


def _reference(scores, targets):
    """Pure-JAX reference matching nn.LogSoftmax + nn.NLLLoss (ignore_index=-100)."""
    logp = jax.nn.log_softmax(scores.astype(jnp.float32), axis=1)
    t = targets.astype(jnp.int32)
    valid = t != _IGNORE_INDEX
    safe_t = jnp.where(valid, t, 0)
    picked = jnp.take_along_axis(logp, safe_t.reshape(-1, 1), axis=1)[:, 0]
    picked = jnp.where(valid, picked, 0.0)
    return -jnp.sum(picked) / jnp.sum(valid.astype(jnp.float32))


if __name__ == "__main__":
    key = jax.random.PRNGKey(0)
    k_scores, k_targets = jax.random.split(key)

    # geoscorer-style spatial loss: rows = batch * voxel positions, columns = classes
    B, S, C = 2, 10, 100                      # N = B * S^3 = 2000 rows (ragged tiles), C = 100
    N = B * S * S * S
    scores = jax.random.normal(k_scores, (N, C), dtype=jnp.float32)
    targets = jax.random.randint(k_targets, (N,), 0, C, dtype=jnp.int32)
    # a few ignored entries (PyTorch NLLLoss default ignore_index=-100)
    targets = targets.at[::97].set(_IGNORE_INDEX)

    loss = spatial_emb_loss(scores, targets, force_pallas=True)
    loss = jax.block_until_ready(loss)

    ref = _reference(scores, targets)
    assert jnp.allclose(loss, ref, rtol=1e-4, atol=1e-5), (loss, ref)
    print("KERNEL_OK")
</pallas_src>

<mosaic_0001>
module attributes {stable_mosaic.version = 11 : i64} {
  func.func @_ce_tile_kernel(%arg0: i32, %arg1: memref<256x100xf32, #tpu.memory_space<vmem>>, %arg2: memref<256x1xi32, #tpu.memory_space<vmem>>, %arg3: memref<1x8x128xf32, #tpu.memory_space<vmem>>, %arg4: memref<1x8x128xf32, #tpu.memory_space<vmem>>) attributes {dimension_semantics = [#tpu.dimension_semantics<parallel>], iteration_bounds = array<i64: 8>, scalar_prefetch = 0 : i64, scratch_operands = 0 : i64, tpu.core_type = #tpu.core_type<tc>, window_params = [{transform_indices = @transform_0, window_bounds = array<i64: 256, 100>}, {transform_indices = @transform_1, window_bounds = array<i64: 256, 1>}, {transform_indices = @transform_2, window_bounds = array<i64: 1, 8, 128>}, {transform_indices = @transform_3, window_bounds = array<i64: 1, 8, 128>}]} {
    %c0 = arith.constant 0 : index
    %c0_0 = arith.constant 0 : index
    %0 = vector.load %arg1[%c0, %c0_0] : memref<256x100xf32, #tpu.memory_space<vmem>>, vector<256x100xf32>
    %c0_1 = arith.constant 0 : index
    %c0_2 = arith.constant 0 : index
    %1 = vector.load %arg2[%c0_1, %c0_2] : memref<256x1xi32, #tpu.memory_space<vmem>>, vector<256x1xi32>
    %2 = tpu.iota {dimensions = array<i32: 0>} : vector<256x1xi32>
    %c256_i32 = arith.constant 256 : i32
    %3 = arith.muli %arg0, %c256_i32 : i32
    %4 = vector.broadcast %3 : i32 to vector<256x1xi32>
    %5 = arith.addi %2, %4 : vector<256x1xi32>
    %c-100_i32 = arith.constant -100 : i32
    %6 = vector.broadcast %c-100_i32 : i32 to vector<256x1xi32>
    %7 = arith.cmpi ne, %1, %6 : vector<256x1xi32>
    %c2000_i32 = arith.constant 2000 : i32
    %8 = vector.broadcast %c2000_i32 : i32 to vector<256x1xi32>
    %9 = arith.cmpi slt, %5, %8 : vector<256x1xi32>
    %10 = arith.andi %7, %9 : vector<256x1xi1>
    %cst = arith.constant dense<0xFF800000> : vector<256xf32>
    %11 = vector.multi_reduction <maximumf>, %0, %cst [1] : vector<256x100xf32> to vector<256xf32>
    %12 = vector.shape_cast %11 : vector<256xf32> to vector<256x1xf32>
    %13 = vector.broadcast %12 : vector<256x1xf32> to vector<256x100xf32>
    %14 = arith.subf %0, %13 : vector<256x100xf32>
    %15 = math.exp %14 : vector<256x100xf32>
    %cst_3 = arith.constant dense<0.000000e+00> : vector<256xf32>
    %16 = vector.multi_reduction <add>, %15, %cst_3 [1] : vector<256x100xf32> to vector<256xf32>
    %17 = vector.shape_cast %16 : vector<256xf32> to vector<256x1xf32>
    %18 = math.log %17 : vector<256x1xf32>
    %19 = arith.addf %18, %12 : vector<256x1xf32>
    %20 = tpu.iota {dimensions = array<i32: 1>} : vector<256x100xi32>
    %21 = vector.broadcast %1 : vector<256x1xi32> to vector<256x100xi32>
    %22 = arith.cmpi eq, %20, %21 : vector<256x100xi32>
    %cst_4 = arith.constant 0.000000e+00 : f32
    %23 = vector.broadcast %cst_4 : f32 to vector<256x100xf32>
    %24 = arith.select %22, %0, %23 : vector<256x100xi1>, vector<256x100xf32>
    %cst_5 = arith.constant dense<0.000000e+00> : vector<256xf32>
    %25 = vector.multi_reduction <add>, %24, %cst_5 [1] : vector<256x100xf32> to vector<256xf32>
    %26 = vector.shape_cast %25 : vector<256xf32> to vector<256x1xf32>
    %27 = arith.subf %19, %26 : vector<256x1xf32>
    %cst_6 = arith.constant 0.000000e+00 : f32
    %28 = vector.broadcast %cst_6 : f32 to vector<256x1xf32>
    %29 = arith.select %10, %27, %28 : vector<256x1xi1>, vector<256x1xf32>
    %30 = vector.shape_cast %29 : vector<256x1xf32> to vector<1x256x1xf32>
    %cst_7 = arith.constant dense<0.000000e+00> : vector<1xf32>
    %31 = vector.multi_reduction <add>, %30, %cst_7 [1, 2] : vector<1x256x1xf32> to vector<1xf32>
    %32 = vector.shape_cast %31 : vector<1xf32> to vector<1x1x1xf32>
    %33 = vector.extract %32[0, 0, 0] : f32 from vector<1x1x1xf32>
    %34 = arith.extui %10 : vector<256x1xi1> to vector<256x1xi32>
    %35 = arith.sitofp %34 : vector<256x1xi32> to vector<256x1xf32>
    %36 = vector.shape_cast %35 : vector<256x1xf32> to vector<1x256x1xf32>
    %cst_8 = arith.constant dense<0.000000e+00> : vector<1xf32>
    %37 = vector.multi_reduction <add>, %36, %cst_8 [1, 2] : vector<1x256x1xf32> to vector<1xf32>
    %38 = vector.shape_cast %37 : vector<1xf32> to vector<1x1x1xf32>
    %39 = vector.extract %38[0, 0, 0] : f32 from vector<1x1x1xf32>
    %40 = vector.broadcast %33 : f32 to vector<1x8x128xf32>
    %c0_9 = arith.constant 0 : index
    %c0_10 = arith.constant 0 : index
    %c0_11 = arith.constant 0 : index
    %41 = vector.load %arg3[%c0_9, %c0_10, %c0_11] : memref<1x8x128xf32, #tpu.memory_space<vmem>>, vector<1x8x128xf32>
    tpu.vector_store %arg3[%c0_9, %c0_10, %c0_11], %40 {strides = array<i32>} : memref<1x8x128xf32, #tpu.memory_space<vmem>>, vector<1x8x128xf32>,
    %42 = vector.broadcast %39 : f32 to vector<1x8x128xf32>
    %c0_12 = arith.constant 0 : index
    %c0_13 = arith.constant 0 : index
    %c0_14 = arith.constant 0 : index
    %43 = vector.load %arg4[%c0_12, %c0_13, %c0_14] : memref<1x8x128xf32, #tpu.memory_space<vmem>>, vector<1x8x128xf32>
    tpu.vector_store %arg4[%c0_12, %c0_13, %c0_14], %42 {strides = array<i32>} : memref<1x8x128xf32, #tpu.memory_space<vmem>>, vector<1x8x128xf32>,
    return
  }
  func.func @transform_0(%arg0: i32) -> (i32, i32) {
    %c0_i32 = arith.constant 0 : i32
    %c0_i32_0 = arith.constant 0 : i32
    return %arg0, %c0_i32 : i32, i32
  }
  func.func @transform_1(%arg0: i32) -> (i32, i32) {
    %c0_i32 = arith.constant 0 : i32
    %c0_i32_0 = arith.constant 0 : i32
    return %arg0, %c0_i32 : i32, i32
  }
  func.func @transform_2(%arg0: i32) -> (i32, i32, i32) {
    %c0_i32 = arith.constant 0 : i32
    %c0_i32_0 = arith.constant 0 : i32
    %c0_i32_1 = arith.constant 0 : i32
    return %arg0, %c0_i32, %c0_i32_0 : i32, i32, i32
  }
  func.func @transform_3(%arg0: i32) -> (i32, i32, i32) {
    %c0_i32 = arith.constant 0 : i32
    %c0_i32_0 = arith.constant 0 : i32
    %c0_i32_1 = arith.constant 0 : i32
    return %arg0, %c0_i32, %c0_i32_0 : i32, i32, i32
  }
}

</mosaic_0001>

<llo_original>
// kernel: tpu_custom_call.1
$region0: #{tpu_custom_call.1}
  #allocation0 [shape = 'u32[]', space=smem, size = 0x4, offset = 0x4, fixed_abs, tag = 'smem constant byte address 0x4 - core index']
  #allocation1 [shape = 'u32[144,128]{1,0:T(1,128)}', space=vmem, size = 0x12000, scoped, tag = 'internal scratch']
  %s0 = inlined_call_operand.vmem [shape: f32[2000,100], index: 0, kind: input, shape index: {}]
  %s1 = inlined_call_operand.vmem [shape: s32[2000,1], index: 1, kind: input, shape index: {}]
  %s2 = inlined_call_operand.hbm [shape: f32[8,8,128], index: 2, kind: output, shape index: {0}]
  %s3 = inlined_call_operand.hbm [shape: f32[8,8,128], index: 3, kind: output, shape index: {1}]
  %4 = xla_tuple %s2, %s3
  %s5 = sld [smem:[#allocation0]]
  $region49: #{tpu_custom_call.1} parent=0
    _
  %s7 = ssub.s32 1, %s5
  %s8 = scalar_select 0, %s7, %s5
  $region1: #{tpu_custom_call.1} parent=0
    #allocation2 [shape = 'u8[8192]{0}', space=vmem, size = 0x2000, scoped, tag = 'output window, operand 0']
    #allocation3 [shape = 's32[2]{0}', space=sflag, size = 0x8, scoped, tag = 'scoped memory for tpu_custom_call.1']
    #allocation4 [shape = 'u8[8192]{0}', space=vmem, size = 0x2000, scoped, tag = 'output window, operand 1']
    #allocation5 [shape = 's32[2]{0}', space=sflag, size = 0x8, scoped, tag = 'scoped memory for tpu_custom_call.1']
    %9 = vsyncpa [#allocation3], 0
    %s10 = scalar_lea.sflag [#allocation3], 1
    %11 = vsyncpa %s10, 0
    %12 = vsyncpa [#allocation5], 0
    %s13 = scalar_lea.sflag [#allocation5], 1
    %14 = vsyncpa %s13, 0
    loop: start=0, step=1, limit=10
    $region2: #{tpu_custom_call.1} parent=1 // loop_pre_header
      _
    $region3: #{tpu_custom_call.1} parent=1 // loop_header
      %s16 = sphi 0, %s20
      %p17 = scmp.ge.s32.totalorder %s16, 10
      %s26 = sphi 0, %s28
      %s29 = sphi 0, %s26
      %s30 = sphi 0, %s29
      %s46 = sphi 0, %s30
      %s52 = sphi 0, %s54
      %s55 = sphi 0, %s52
      %s56 = sphi 0, %s55
      %s72 = sphi 0, %s56
      %s78 = sphi 0, %s80
      %s81 = sphi 0, %s78
      %s82 = sphi 0, %s81
      %s98 = sphi 0, %s82
      %s104 = sphi 0, %s106
      %s107 = sphi 0, %s104
      %s108 = sphi 0, %s107
      %s124 = sphi 0, %s108
    $region4: #{tpu_custom_call.1} parent=1 // loop_header_branch
      %19 = sbr.rel (%p17) target = $region8
    $region5: #{tpu_custom_call.1} parent=1 // loop_body
      %s21 = ssub.s32 %s16, 1
      %s22 = ssub.s32 %s16, 2
      %s23 = sadd.s32 %s16, 1
      %s24 = ssub.s32 %s16, %s23
      %p25 = scmp.eq.s32.totalorder %s24, 0
      %s27 = sadd.s32 %s26, 1
      %s28 = scalar_select %p25, %s26, %s27
      %p31 = pneg %p25
      %p32 = scmp.eq.s32.totalorder %s16, 7
      %p33 = por %p31, %p32
      %p34 = scmp.ne.s32.totalorder %s26, %s29
      %p35 = scmp.eq.s32.totalorder %s16, 0
      %p36 = por %p34, %p35
      %p37 = scmp.ne.s32.totalorder %s26, %s29
      %p38 = scmp.eq.s32.totalorder %s21, 7
      %p39 = por %p37, %p38
      %p40 = scmp.ne.s32.totalorder %s29, %s30
      %p41 = scmp.eq.s32.totalorder %s21, 0
      %p42 = por %p40, %p41
      %p43 = scmp.ne.s32.totalorder %s29, %s30
      %p44 = scmp.eq.s32.totalorder %s22, 7
      %p45 = por %p43, %p44
      %p47 = scmp.ne.s32.totalorder %s30, %s46
      %p48 = scmp.eq.s32.totalorder %s22, 0
      %p49 = por %p47, %p48
      %s50 = ssub.s32 %s16, %s23
      %p51 = scmp.eq.s32.totalorder %s50, 0
      %s53 = sadd.s32 %s52, 1
      %s54 = scalar_select %p51, %s52, %s53
      %p57 = pneg %p51
      %p58 = scmp.eq.s32.totalorder %s16, 7
      %p59 = por %p57, %p58
      %p60 = scmp.ne.s32.totalorder %s52, %s55
      %p61 = scmp.eq.s32.totalorder %s16, 0
      %p62 = por %p60, %p61
      %p63 = scmp.ne.s32.totalorder %s52, %s55
      %p64 = scmp.eq.s32.totalorder %s21, 7
      %p65 = por %p63, %p64
      %p66 = scmp.ne.s32.totalorder %s55, %s56
      %p67 = scmp.eq.s32.totalorder %s21, 0
      %p68 = por %p66, %p67
      %p69 = scmp.ne.s32.totalorder %s55, %s56
      %p70 = scmp.eq.s32.totalorder %s22, 7
      %p71 = por %p69, %p70
      %p73 = scmp.ne.s32.totalorder %s56, %s72
      %p74 = scmp.eq.s32.totalorder %s22, 0
      %p75 = por %p73, %p74
      %s76 = ssub.s32 %s16, %s23
      %p77 = scmp.eq.s32.totalorder %s76, 0
      %s79 = sadd.s32 %s78, 1
      %s80 = scalar_select %p77, %s78, %s79
      %p83 = pneg %p77
      %p84 = scmp.eq.s32.totalorder %s16, 7
      %p85 = por %p83, %p84
      %p86 = scmp.ne.s32.totalorder %s78, %s81
      %p87 = scmp.eq.s32.totalorder %s16, 0
      %p88 = por %p86, %p87
      %p89 = scmp.ne.s32.totalorder %s78, %s81
      %p90 = scmp.eq.s32.totalorder %s21, 7
      %p91 = por %p89, %p90
      %p92 = scmp.ne.s32.totalorder %s81, %s82
      %p93 = scmp.eq.s32.totalorder %s21, 0
      %p94 = por %p92, %p93
      %p95 = scmp.ne.s32.totalorder %s81, %s82
      %p96 = scmp.eq.s32.totalorder %s22, 7
      %p97 = por %p95, %p96
      %p99 = scmp.ne.s32.totalorder %s82, %s98
      %p100 = scmp.eq.s32.totalorder %s22, 0
      %p101 = por %p99, %p100
      %s102 = ssub.s32 %s16, %s23
      %p103 = scmp.eq.s32.totalorder %s102, 0
      %s105 = sadd.s32 %s104, 1
      %s106 = scalar_select %p103, %s104, %s105
      %p109 = pneg %p103
      %p110 = scmp.eq.s32.totalorder %s16, 7
      %p111 = por %p109, %p110
      %p112 = scmp.ne.s32.totalorder %s104, %s107
      %p113 = scmp.eq.s32.totalorder %s16, 0
      %p114 = por %p112, %p113
      %p115 = scmp.ne.s32.totalorder %s104, %s107
      %p116 = scmp.eq.s32.totalorder %s21, 7
      %p117 = por %p115, %p116
      %p118 = scmp.ne.s32.totalorder %s107, %s108
      %p119 = scmp.eq.s32.totalorder %s21, 0
      %p120 = por %p118, %p119
      %p121 = scmp.ne.s32.totalorder %s107, %s108
      %p122 = scmp.eq.s32.totalorder %s22, 7
      %p123 = por %p121, %p122
      %p125 = scmp.ne.s32.totalorder %s108, %s124
      %p126 = scmp.eq.s32.totalorder %s22, 0
      %p127 = por %p125, %p126
      %p128 = scmp.le.s32.totalorder 1, %s16
      %p129 = scmp.lt.s32.totalorder %s16, 9
      %p130 = pnand %p128, %p129
      %p131 = pneg %p130
      // Predicated region
      $region9: #{tpu_custom_call.1} parent=5 // pred_check
        _
      $region10: #{tpu_custom_call.1} parent=5 // pred_check_branch
        %133 = sbr.rel (%p130) target = $region12
      $region11: #{tpu_custom_call.1} parent=5 // pred_region
        %s134 = ssub.s32 %s16, 1
      $region12: #{tpu_custom_call.1} parent=5 // pred_fallthru
        _
      %p135 = scmp.lt.s32.totalorder %s16, 8
      // Predicated region
      $region13: #{tpu_custom_call.1} parent=5 // pred_check
        %p136 = pneg %p135
      $region14: #{tpu_custom_call.1} parent=5 // pred_check_branch
        %138 = sbr.rel (%p136) target = $region16
      $region15: #{tpu_custom_call.1} parent=5 // pred_region
        // Predicated region
        $region17: #{tpu_custom_call.1} parent=15 // pred_check
          %p139 = pneg %p36
        $region18: #{tpu_custom_call.1} parent=15 // pred_check_branch
          %141 = sbr.rel (%p139) target = $region20
        $region19: #{tpu_custom_call.1} parent=15 // pred_region
          %s142 = smul.u32 32, %s16
          %s143 = ssub.s32 250, %s142
          %p144 = scmp.lt.s32.totalorder %s143, 32
          %s145 = scalar_select %p144, %s143, 32
          %s146 = smul.u32 128, %s145
          %p147 = scmp.lt.s32.totalorder %s142, 249
          %s148 = scalar_select %p147, %s142, 249
          %s149 = smul.addr %s148, 8
          %s150 = scalar_lea.vmem %s0, %s149
          %s151 = smul.u32 32, %s16
          %s152 = ssub.s32 250, %s151
          %p153 = scmp.lt.s32.totalorder %s152, 32
          %s154 = scalar_select %p153, %s152, 32
          %s155 = smul.u32 128, %s154
        $region20: #{tpu_custom_call.1} parent=15 // pred_fallthru
          _
        // Predicated region
        $region21: #{tpu_custom_call.1} parent=15 // pred_check
          %p156 = pneg %p62
        $region22: #{tpu_custom_call.1} parent=15 // pred_check_branch
          %158 = sbr.rel (%p156) target = $region24
        $region23: #{tpu_custom_call.1} parent=15 // pred_region
          %s159 = smul.u32 32, %s16
          %s160 = ssub.s32 250, %s159
          %p161 = scmp.lt.s32.totalorder %s160, 32
          %s162 = scalar_select %p161, %s160, 32
          %s163 = smul.u32 128, %s162
          %p164 = scmp.lt.s32.totalorder %s159, 249
          %s165 = scalar_select %p164, %s159, 249
          %s166 = smul.addr %s165, 8
          %s167 = scalar_lea.vmem %s1, %s166
          %s168 = smul.u32 32, %s16
          %s169 = ssub.s32 250, %s168
          %p170 = scmp.lt.s32.totalorder %s169, 32
          %s171 = scalar_select %p170, %s169, 32
          %s172 = smul.u32 128, %s171
        $region24: #{tpu_custom_call.1} parent=15 // pred_fallthru
          _
      $region16: #{tpu_custom_call.1} parent=5 // pred_fallthru
        _
      %p173 = scmp.le.s32.totalorder 1, %s16
      %p174 = scmp.lt.s32.totalorder %s16, 9
      %p175 = pnand %p173, %p174
      %p176 = pneg %p175
      // Predicated region
      $region25: #{tpu_custom_call.1} parent=5 // pred_check
        _
      $region26: #{tpu_custom_call.1} parent=5 // pred_check_branch
        %178 = sbr.rel (%p175) target = $region28
      $region27: #{tpu_custom_call.1} parent=5 // pred_region
        %s179 = ssub.s32 %s16, 1
        %s180 = smul.u32 32, %s21
        %s181 = ssub.s32 250, %s180
        %p182 = scmp.lt.s32.totalorder %s181, 32
        %s183 = scalar_select %p182, %s181, 32
        %s184 = smul.u32 128, %s183
        %p185 = scmp.lt.s32.totalorder %s180, 249
        %s186 = scalar_select %p185, %s180, 249
        %s187 = smul.addr %s186, 8
        %s188 = scalar_lea.vmem %s0, %s187
        %p189 = pneg %p42
        %p190 = pneg %p39
        %s191 = smul.u32 32, %s21
        %s192 = ssub.s32 250, %s191
        %p193 = scmp.lt.s32.totalorder %s192, 32
        %s194 = scalar_select %p193, %s192, 32
        %s195 = smul.u32 128, %s194
        %p196 = scmp.lt.s32.totalorder %s191, 249
        %s197 = scalar_select %p196, %s191, 249
        %s198 = smul.addr %s197, 8
        %s199 = scalar_lea.vmem %s1, %s198
        %p200 = pneg %p68
        %p201 = pneg %p65
        %p202 = pneg %p94
        %p203 = pneg %p91
        %s204 = sand.u32 %s81, 1
        %s205 = scalar_lea.sflag [#allocation3], %s204
        %s206 = sand.u32 %s81, 1
        %s207 = smul.addr %s206, 8
        %s208 = scalar_lea.vmem [#allocation2], %s207
        %p209 = pneg %p120
        %p210 = pneg %p117
        %s211 = sand.u32 %s107, 1
        %s212 = scalar_lea.sflag [#allocation5], %s211
        %s213 = sand.u32 %s107, 1
        %s214 = smul.addr %s213, 8
        %s215 = scalar_lea.vmem [#allocation4], %s214
        %s216 = smul.u32 32, %s21
        %s217 = ssub.s32 250, %s216
        %p218 = scmp.lt.s32.totalorder %s217, 32
        %s219 = scalar_select %p218, %s217, 32
        %s220 = smul.u32 128, %s219
        %p221 = scmp.lt.s32.totalorder %s216, 249
        %s222 = scalar_select %p221, %s216, 249
        %s223 = smul.addr %s222, 8
        %s224 = scalar_lea.vmem %s0, %s223
        %s225 = smul.u32 32, %s21
        %s226 = ssub.s32 250, %s225
        %p227 = scmp.lt.s32.totalorder %s226, 32
        %s228 = scalar_select %p227, %s226, 32
        %s229 = smul.u32 128, %s228
        %s230 = smul.u32 32, %s21
        %s231 = ssub.s32 250, %s230
        %p232 = scmp.lt.s32.totalorder %s231, 32
        %s233 = scalar_select %p232, %s231, 32
        %s234 = smul.u32 128, %s233
        %p235 = scmp.lt.s32.totalorder %s230, 249
        %s236 = scalar_select %p235, %s230, 249
        %s237 = smul.addr %s236, 8
        %s238 = scalar_lea.vmem %s1, %s237
        %s239 = smul.u32 32, %s21
        %s240 = ssub.s32 250, %s239
        %p241 = scmp.lt.s32.totalorder %s240, 32
        %s242 = scalar_select %p241, %s240, 32
        %s243 = smul.u32 128, %s242
        %v244 = vld [vmem:[%s224] sm:$0xff]
        %v245 = vld [vmem:[%s224 + $0x8] sm:$0xff]
        %v246 = vld [vmem:[%s224 + $0x10] sm:$0xff]
        %v247 = vld [vmem:[%s224 + $0x18] sm:$0xff]
        %v248 = vld [vmem:[%s224 + $0x20] sm:$0xff]
        %v249 = vld [vmem:[%s224 + $0x28] sm:$0xff]
        %v250 = vld [vmem:[%s224 + $0x30] sm:$0xff]
        %v251 = vld [vmem:[%s224 + $0x38] sm:$0xff]
        %v252 = vld [vmem:[%s224 + $0x40] sm:$0xff]
        %v253 = vld [vmem:[%s224 + $0x48] sm:$0xff]
        %v254 = vld [vmem:[%s224 + $0x50] sm:$0xff]
        %v255 = vld [vmem:[%s224 + $0x58] sm:$0xff]
        %v256 = vld [vmem:[%s224 + $0x60] sm:$0xff]
        %v257 = vld [vmem:[%s224 + $0x68] sm:$0xff]
        %v258 = vld [vmem:[%s224 + $0x70] sm:$0xff]
        %v259 = vld [vmem:[%s224 + $0x78] sm:$0xff]
        %v260 = vld [vmem:[%s224 + $0x80] sm:$0xff]
        %v261 = vld [vmem:[%s224 + $0x88] sm:$0xff]
        %v262 = vld [vmem:[%s224 + $0x90] sm:$0xff]
        %v263 = vld [vmem:[%s224 + $0x98] sm:$0xff]
        %v264 = vld [vmem:[%s224 + $0xa0] sm:$0xff]
        %v265 = vld [vmem:[%s224 + $0xa8] sm:$0xff]
        %v266 = vld [vmem:[%s224 + $0xb0] sm:$0xff]
        %v267 = vld [vmem:[%s224 + $0xb8] sm:$0xff]
        %v268 = vld [vmem:[%s224 + $0xc0] sm:$0xff]
        %v269 = vld [vmem:[%s224 + $0xc8] sm:$0xff]
        %v270 = vld [vmem:[%s224 + $0xd0] sm:$0xff]
        %v271 = vld [vmem:[%s224 + $0xd8] sm:$0xff]
        %v272 = vld [vmem:[%s224 + $0xe0] sm:$0xff]
        %v273 = vld [vmem:[%s224 + $0xe8] sm:$0xff]
        %v274 = vld [vmem:[%s224 + $0xf0] sm:$0xff]
        %v275 = vld [vmem:[%s224 + $0xf8] sm:$0xff]
        %v276 = vld [vmem:[%s238] sm:$0xff]
        %v277 = vld [vmem:[%s238 + $0x8] sm:$0xff]
        %v278 = vld [vmem:[%s238 + $0x10] sm:$0xff]
        %v279 = vld [vmem:[%s238 + $0x18] sm:$0xff]
        %v280 = vld [vmem:[%s238 + $0x20] sm:$0xff]
        %v281 = vld [vmem:[%s238 + $0x28] sm:$0xff]
        %v282 = vld [vmem:[%s238 + $0x30] sm:$0xff]
        %v283 = vld [vmem:[%s238 + $0x38] sm:$0xff]
        %v284 = vld [vmem:[%s238 + $0x40] sm:$0xff]
        %v285 = vld [vmem:[%s238 + $0x48] sm:$0xff]
        %v286 = vld [vmem:[%s238 + $0x50] sm:$0xff]
        %v287 = vld [vmem:[%s238 + $0x58] sm:$0xff]
        %v288 = vld [vmem:[%s238 + $0x60] sm:$0xff]
        %v289 = vld [vmem:[%s238 + $0x68] sm:$0xff]
        %v290 = vld [vmem:[%s238 + $0x70] sm:$0xff]
        %v291 = vld [vmem:[%s238 + $0x78] sm:$0xff]
        %v292 = vld [vmem:[%s238 + $0x80] sm:$0xff]
        %v293 = vld [vmem:[%s238 + $0x88] sm:$0xff]
        %v294 = vld [vmem:[%s238 + $0x90] sm:$0xff]
        %v295 = vld [vmem:[%s238 + $0x98] sm:$0xff]
        %v296 = vld [vmem:[%s238 + $0xa0] sm:$0xff]
        %v297 = vld [vmem:[%s238 + $0xa8] sm:$0xff]
        %v298 = vld [vmem:[%s238 + $0xb0] sm:$0xff]
        %v299 = vld [vmem:[%s238 + $0xb8] sm:$0xff]
        %v300 = vld [vmem:[%s238 + $0xc0] sm:$0xff]
        %v301 = vld [vmem:[%s238 + $0xc8] sm:$0xff]
        %v302 = vld [vmem:[%s238 + $0xd0] sm:$0xff]
        %v303 = vld [vmem:[%s238 + $0xd8] sm:$0xff]
        %v304 = vld [vmem:[%s238 + $0xe0] sm:$0xff]
        %v305 = vld [vmem:[%s238 + $0xe8] sm:$0xff]
        %v306 = vld [vmem:[%s238 + $0xf0] sm:$0xff]
        %v307 = vld [vmem:[%s238 + $0xf8] sm:$0xff]
        %v308 = vlaneseq
        %v309 = vshrl.u32 %v308, 7
        %v310 = vadd.s32 %v309, 8
        %v311 = vadd.s32 %v309, 16
        %v312 = vadd.s32 %v309, 24
        %v313 = vadd.s32 %v309, 32
        %v314 = vadd.s32 %v309, 40
        %v315 = vadd.s32 %v309, 48
        %v316 = vadd.s32 %v309, 56
        %v317 = vadd.s32 %v309, 64
        %v318 = vadd.s32 %v309, 72
        %v319 = vadd.s32 %v309, 80
        %v320 = vadd.s32 %v309, 88
        %v321 = vadd.s32 %v309, 96
        %v322 = vadd.s32 %v309, 104
        %v323 = vadd.s32 %v309, 112
        %v324 = vadd.s32 %v309, 120
        %v325 = vadd.s32 %v309, 128
        %v326 = vadd.s32 %v309, 136
        %v327 = vadd.s32 %v309, 144
        %v328 = vadd.s32 %v309, 152
        %v329 = vadd.s32 %v309, 160
        %v330 = vadd.s32 %v309, 168
        %v331 = vadd.s32 %v309, 176
        %v332 = vadd.s32 %v309, 184
        %v333 = vadd.s32 %v309, 192
        %v334 = vadd.s32 %v309, 200
        %v335 = vadd.s32 %v309, 208
        %v336 = vadd.s32 %v309, 216
        %v337 = vadd.s32 %v309, 224
        %v338 = vadd.s32 %v309, 232
        %v339 = vadd.s32 %v309, 240
        %v340 = vadd.s32 %v309, 248
        %s341 = smul.u32 %s21, 256
        %v342 = vstv %s341
        %v343 = vadd.s32 %v309, %v342
        %v344 = vadd.s32 %v310, %v342
        %v345 = vadd.s32 %v311, %v342
        %v346 = vadd.s32 %v312, %v342
        %v347 = vadd.s32 %v313, %v342
        %v348 = vadd.s32 %v314, %v342
        %v349 = vadd.s32 %v315, %v342
        %v350 = vadd.s32 %v316, %v342
        %v351 = vadd.s32 %v317, %v342
        %v352 = vadd.s32 %v318, %v342
        %v353 = vadd.s32 %v319, %v342
        %v354 = vadd.s32 %v320, %v342
        %v355 = vadd.s32 %v321, %v342
        %v356 = vadd.s32 %v322, %v342
        %v357 = vadd.s32 %v323, %v342
        %v358 = vadd.s32 %v324, %v342
        %v359 = vadd.s32 %v325, %v342
        %v360 = vadd.s32 %v326, %v342
        %v361 = vadd.s32 %v327, %v342
        %v362 = vadd.s32 %v328, %v342
        %v363 = vadd.s32 %v329, %v342
        %v364 = vadd.s32 %v330, %v342
        %v365 = vadd.s32 %v331, %v342
        %v366 = vadd.s32 %v332, %v342
        %v367 = vadd.s32 %v333, %v342
        %v368 = vadd.s32 %v334, %v342
        %v369 = vadd.s32 %v335, %v342
        %v370 = vadd.s32 %v336, %v342
        %v371 = vadd.s32 %v337, %v342
        %v372 = vadd.s32 %v338, %v342
        %v373 = vadd.s32 %v339, %v342
        %v374 = vadd.s32 %v340, %v342
        %vm375 = vcmp.ne.s32.totalorder %v276, 4294967196
        %vm376 = vcmp.ne.s32.totalorder %v277, 4294967196
        %vm377 = vcmp.ne.s32.totalorder %v278, 4294967196
        %vm378 = vcmp.ne.s32.totalorder %v279, 4294967196
        %vm379 = vcmp.ne.s32.totalorder %v280, 4294967196
        %vm380 = vcmp.ne.s32.totalorder %v281, 4294967196
        %vm381 = vcmp.ne.s32.totalorder %v282, 4294967196
        %vm382 = vcmp.ne.s32.totalorder %v283, 4294967196
        %vm383 = vcmp.ne.s32.totalorder %v284, 4294967196
        %vm384 = vcmp.ne.s32.totalorder %v285, 4294967196
        %vm385 = vcmp.ne.s32.totalorder %v286, 4294967196
        %vm386 = vcmp.ne.s32.totalorder %v287, 4294967196
        %vm387 = vcmp.ne.s32.totalorder %v288, 4294967196
        %vm388 = vcmp.ne.s32.totalorder %v289, 4294967196
        %vm389 = vcmp.ne.s32.totalorder %v290, 4294967196
        %vm390 = vcmp.ne.s32.totalorder %v291, 4294967196
        %vm391 = vcmp.ne.s32.totalorder %v292, 4294967196
        %vm392 = vcmp.ne.s32.totalorder %v293, 4294967196
        %vm393 = vcmp.ne.s32.totalorder %v294, 4294967196
        %vm394 = vcmp.ne.s32.totalorder %v295, 4294967196
        %vm395 = vcmp.ne.s32.totalorder %v296, 4294967196
        %vm396 = vcmp.ne.s32.totalorder %v297, 4294967196
        %vm397 = vcmp.ne.s32.totalorder %v298, 4294967196
        %vm398 = vcmp.ne.s32.totalorder %v299, 4294967196
        %vm399 = vcmp.ne.s32.totalorder %v300, 4294967196
        %vm400 = vcmp.ne.s32.totalorder %v301, 4294967196
        %vm401 = vcmp.ne.s32.totalorder %v302, 4294967196
        %vm402 = vcmp.ne.s32.totalorder %v303, 4294967196
        %vm403 = vcmp.ne.s32.totalorder %v304, 4294967196
        %vm404 = vcmp.ne.s32.totalorder %v305, 4294967196
        %vm405 = vcmp.ne.s32.totalorder %v306, 4294967196
        %vm406 = vcmp.ne.s32.totalorder %v307, 4294967196
        %vm407 = vcmp.lt.s32.totalorder %v343, 2000
        %vm408 = vcmp.lt.s32.totalorder %v344, 2000
        %vm409 = vcmp.lt.s32.totalorder %v345, 2000
        %vm410 = vcmp.lt.s32.totalorder %v346, 2000
        %vm411 = vcmp.lt.s32.totalorder %v347, 2000
        %vm412 = vcmp.lt.s32.totalorder %v348, 2000
        %vm413 = vcmp.lt.s32.totalorder %v349, 2000
        %vm414 = vcmp.lt.s32.totalorder %v350, 2000
        %vm415 = vcmp.lt.s32.totalorder %v351, 2000
        %vm416 = vcmp.lt.s32.totalorder %v352, 2000
        %vm417 = vcmp.lt.s32.totalorder %v353, 2000
        %vm418 = vcmp.lt.s32.totalorder %v354, 2000
        %vm419 = vcmp.lt.s32.totalorder %v355, 2000
        %vm420 = vcmp.lt.s32.totalorder %v356, 2000
        %vm421 = vcmp.lt.s32.totalorder %v357, 2000
        %vm422 = vcmp.lt.s32.totalorder %v358, 2000
        %vm423 = vcmp.lt.s32.totalorder %v359, 2000
        %vm424 = vcmp.lt.s32.totalorder %v360, 2000
        %vm425 = vcmp.lt.s32.totalorder %v361, 2000
        %vm426 = vcmp.lt.s32.totalorder %v362, 2000
        %vm427 = vcmp.lt.s32.totalorder %v363, 2000
        %vm428 = vcmp.lt.s32.totalorder %v364, 2000
        %vm429 = vcmp.lt.s32.totalorder %v365, 2000
        %vm430 = vcmp.lt.s32.totalorder %v366, 2000
        %vm431 = vcmp.lt.s32.totalorder %v367, 2000
        %vm432 = vcmp.lt.s32.totalorder %v368, 2000
        %vm433 = vcmp.lt.s32.totalorder %v369, 2000
        %vm434 = vcmp.lt.s32.totalorder %v370, 2000
        %vm435 = vcmp.lt.s32.totalorder %v371, 2000
        %vm436 = vcmp.lt.s32.totalorder %v372, 2000
        %vm437 = vcmp.lt.s32.totalorder %v373, 2000
        %vm438 = vcmp.lt.s32.totalorder %v374, 2000
        %vm439 = vmand %vm375, %vm407
        %vm440 = vmand %vm376, %vm408
        %vm441 = vmand %vm377, %vm409
        %vm442 = vmand %vm378, %vm410
        %vm443 = vmand %vm379, %vm411
        %vm444 = vmand %vm380, %vm412
        %vm445 = vmand %vm381, %vm413
        %vm446 = vmand %vm382, %vm414
        %vm447 = vmand %vm383, %vm415
        %vm448 = vmand %vm384, %vm416
        %vm449 = vmand %vm385, %vm417
        %vm450 = vmand %vm386, %vm418
        %vm451 = vmand %vm387, %vm419
        %vm452 = vmand %vm388, %vm420
        %vm453 = vmand %vm389, %vm421
        %vm454 = vmand %vm390, %vm422
        %vm455 = vmand %vm391, %vm423
        %vm456 = vmand %vm392, %vm424
        %vm457 = vmand %vm393, %vm425
        %vm458 = vmand %vm394, %vm426
        %vm459 = vmand %vm395, %vm427
        %vm460 = vmand %vm396, %vm428
        %vm461 = vmand %vm397, %vm429
        %vm462 = vmand %vm398, %vm430
        %vm463 = vmand %vm399, %vm431
        %vm464 = vmand %vm400, %vm432
        %vm465 = vmand %vm401, %vm433
        %vm466 = vmand %vm402, %vm434
        %vm467 = vmand %vm403, %vm435
        %vm468 = vmand %vm404, %vm436
        %vm469 = vmand %vm405, %vm437
        %vm470 = vmand %vm406, %vm438
        %vm471 = vcmask 818176
        %v472 = vsel %vm471, %v244, -inf
        %473 = vmax.xlane.f32.xlu0 %v472
        %v474 = vpop.xlane.xlu0 %473
        %v475 = vsel %vm471, %v245, -inf
        %476 = vmax.xlane.f32.xlu0 %v475
        %v477 = vpop.xlane.xlu0 %476
        %v478 = vsel %vm471, %v246, -inf
        %479 = vmax.xlane.f32.xlu0 %v478
        %v480 = vpop.xlane.xlu0 %479
        %v481 = vsel %vm471, %v247, -inf
        %482 = vmax.xlane.f32.xlu0 %v481
        %v483 = vpop.xlane.xlu0 %482
        %v484 = vsel %vm471, %v248, -inf
        %485 = vmax.xlane.f32.xlu0 %v484
        %v486 = vpop.xlane.xlu0 %485
        %v487 = vsel %vm471, %v249, -inf
        %488 = vmax.xlane.f32.xlu0 %v487
        %v489 = vpop.xlane.xlu0 %488
        %v490 = vsel %vm471, %v250, -inf
        %491 = vmax.xlane.f32.xlu0 %v490
        %v492 = vpop.xlane.xlu0 %491
        %v493 = vsel %vm471, %v251, -inf
        %494 = vmax.xlane.f32.xlu0 %v493
        %v495 = vpop.xlane.xlu0 %494
        %v496 = vsel %vm471, %v252, -inf
        %497 = vmax.xlane.f32.xlu0 %v496
        %v498 = vpop.xlane.xlu0 %497
        %v499 = vsel %vm471, %v253, -inf
        %500 = vmax.xlane.f32.xlu0 %v499
        %v501 = vpop.xlane.xlu0 %500
        %v502 = vsel %vm471, %v254, -inf
        %503 = vmax.xlane.f32.xlu0 %v502
        %v504 = vpop.xlane.xlu0 %503
        %v505 = vsel %vm471, %v255, -inf
        %506 = vmax.xlane.f32.xlu0 %v505
        %v507 = vpop.xlane.xlu0 %506
        %v508 = vsel %vm471, %v256, -inf
        %509 = vmax.xlane.f32.xlu0 %v508
        %v510 = vpop.xlane.xlu0 %509
        %v511 = vsel %vm471, %v257, -inf
        %512 = vmax.xlane.f32.xlu0 %v511
        %v513 = vpop.xlane.xlu0 %512
        %v514 = vsel %vm471, %v258, -inf
        %515 = vmax.xlane.f32.xlu0 %v514
        %v516 = vpop.xlane.xlu0 %515
        %v517 = vsel %vm471, %v259, -inf
        %518 = vmax.xlane.f32.xlu0 %v517
        %v519 = vpop.xlane.xlu0 %518
        %v520 = vsel %vm471, %v260, -inf
        %521 = vmax.xlane.f32.xlu0 %v520
        %v522 = vpop.xlane.xlu0 %521
        %v523 = vsel %vm471, %v261, -inf
        %524 = vmax.xlane.f32.xlu0 %v523
        %v525 = vpop.xlane.xlu0 %524
        %v526 = vsel %vm471, %v262, -inf
        %527 = vmax.xlane.f32.xlu0 %v526
        %v528 = vpop.xlane.xlu0 %527
        %v529 = vsel %vm471, %v263, -inf
        %530 = vmax.xlane.f32.xlu0 %v529
        %v531 = vpop.xlane.xlu0 %530
        %v532 = vsel %vm471, %v264, -inf
        %533 = vmax.xlane.f32.xlu0 %v532
        %v534 = vpop.xlane.xlu0 %533
        %v535 = vsel %vm471, %v265, -inf
        %536 = vmax.xlane.f32.xlu0 %v535
        %v537 = vpop.xlane.xlu0 %536
        %v538 = vsel %vm471, %v266, -inf
        %539 = vmax.xlane.f32.xlu0 %v538
        %v540 = vpop.xlane.xlu0 %539
        %v541 = vsel %vm471, %v267, -inf
        %542 = vmax.xlane.f32.xlu0 %v541
        %v543 = vpop.xlane.xlu0 %542
        %v544 = vsel %vm471, %v268, -inf
        %545 = vmax.xlane.f32.xlu0 %v544
        %v546 = vpop.xlane.xlu0 %545
        %v547 = vsel %vm471, %v269, -inf
        %548 = vmax.xlane.f32.xlu0 %v547
        %v549 = vpop.xlane.xlu0 %548
        %v550 = vsel %vm471, %v270, -inf
        %551 = vmax.xlane.f32.xlu0 %v550
        %v552 = vpop.xlane.xlu0 %551
        %v553 = vsel %vm471, %v271, -inf
        %554 = vmax.xlane.f32.xlu0 %v553
        %v555 = vpop.xlane.xlu0 %554
        %v556 = vsel %vm471, %v272, -inf
        %557 = vmax.xlane.f32.xlu0 %v556
        %v558 = vpop.xlane.xlu0 %557
        %v559 = vsel %vm471, %v273, -inf
        %560 = vmax.xlane.f32.xlu0 %v559
        %v561 = vpop.xlane.xlu0 %560
        %v562 = vsel %vm471, %v274, -inf
        %563 = vmax.xlane.f32.xlu0 %v562
        %v564 = vpop.xlane.xlu0 %563
        %v565 = vsel %vm471, %v275, -inf
        %566 = vmax.xlane.f32.xlu0 %v565
        %v567 = vpop.xlane.xlu0 %566
        %v568 = vsub.f32 %v244, %v474
        %v569 = vsub.f32 %v245, %v477
        %v570 = vsub.f32 %v246, %v480
        %v571 = vsub.f32 %v247, %v483
        %v572 = vsub.f32 %v248, %v486
        %v573 = vsub.f32 %v249, %v489
        %v574 = vsub.f32 %v250, %v492
        %v575 = vsub.f32 %v251, %v495
        %v576 = vsub.f32 %v252, %v498
        %v577 = vsub.f32 %v253, %v501
        %v578 = vsub.f32 %v254, %v504
        %v579 = vsub.f32 %v255, %v507
        %v580 = vsub.f32 %v256, %v510
        %v581 = vsub.f32 %v257, %v513
        %v582 = vsub.f32 %v258, %v516
        %v583 = vsub.f32 %v259, %v519
        %v584 = vsub.f32 %v260, %v522
        %v585 = vsub.f32 %v261, %v525
        %v586 = vsub.f32 %v262, %v528
        %v587 = vsub.f32 %v263, %v531
        %v588 = vsub.f32 %v264, %v534
        %v589 = vsub.f32 %v265, %v537
        %v590 = vsub.f32 %v266, %v540
        %v591 = vsub.f32 %v267, %v543
        %v592 = vsub.f32 %v268, %v546
        %v593 = vsub.f32 %v269, %v549
        %v594 = vsub.f32 %v270, %v552
        %v595 = vsub.f32 %v271, %v555
        %v596 = vsub.f32 %v272, %v558
        %v597 = vsub.f32 %v273, %v561
        %v598 = vsub.f32 %v274, %v564
        %v599 = vsub.f32 %v275, %v567
        %v600 = vmul.f32 %v568, 1.442695
        %v601 = vpow.pop %v600
        %v602 = vmul.f32 %v569, 1.442695
        %v603 = vpow.pop %v602
        %v604 = vmul.f32 %v570, 1.442695
        %v605 = vpow.pop %v604
        %v606 = vmul.f32 %v571, 1.442695
        %v607 = vpow.pop %v606
        %v608 = vmul.f32 %v572, 1.442695
        %v609 = vpow.pop %v608
        %v610 = vmul.f32 %v573, 1.442695
        %v611 = vpow.pop %v610
        %v612 = vmul.f32 %v574, 1.442695
        %v613 = vpow.pop %v612
        %v614 = vmul.f32 %v575, 1.442695
        %v615 = vpow.pop %v614
        %v616 = vmul.f32 %v576, 1.442695
        %v617 = vpow.pop %v616
        %v618 = vmul.f32 %v577, 1.442695
        %v619 = vpow.pop %v618
        %v620 = vmul.f32 %v578, 1.442695
        %v621 = vpow.pop %v620
        %v622 = vmul.f32 %v579, 1.442695
        %v623 = vpow.pop %v622
        %v624 = vmul.f32 %v580, 1.442695
        %v625 = vpow.pop %v624
        %v626 = vmul.f32 %v581, 1.442695
        %v627 = vpow.pop %v626
        %v628 = vmul.f32 %v582, 1.442695
        %v629 = vpow.pop %v628
        %v630 = vmul.f32 %v583, 1.442695
        %v631 = vpow.pop %v630
        %v632 = vmul.f32 %v584, 1.442695
        %v633 = vpow.pop %v632
        %v634 = vmul.f32 %v585, 1.442695
        %v635 = vpow.pop %v634
        %v636 = vmul.f32 %v586, 1.442695
        %v637 = vpow.pop %v636
        %v638 = vmul.f32 %v587, 1.442695
        %v639 = vpow.pop %v638
        %v640 = vmul.f32 %v588, 1.442695
        %v641 = vpow.pop %v640
        %v642 = vmul.f32 %v589, 1.442695
        %v643 = vpow.pop %v642
        %v644 = vmul.f32 %v590, 1.442695
        %v645 = vpow.pop %v644
        %v646 = vmul.f32 %v591, 1.442695
        %v647 = vpow.pop %v646
        %v648 = vmul.f32 %v592, 1.442695
        %v649 = vpow.pop %v648
        %v650 = vmul.f32 %v593, 1.442695
        %v651 = vpow.pop %v650
        %v652 = vmul.f32 %v594, 1.442695
        %v653 = vpow.pop %v652
        %v654 = vmul.f32 %v595, 1.442695
        %v655 = vpow.pop %v654
        %v656 = vmul.f32 %v596, 1.442695
        %v657 = vpow.pop %v656
        %v658 = vmul.f32 %v597, 1.442695
        %v659 = vpow.pop %v658
        %v660 = vmul.f32 %v598, 1.442695
        %v661 = vpow.pop %v660
        %v662 = vmul.f32 %v599, 1.442695
        %v663 = vpow.pop %v662
        %v664 = vsel %vm471, %v601, 0.0
        %665 = vadd.xlane.f32.xlu0 %v664
        %v666 = vpop.xlane.xlu0 %665
        %v667 = vsel %vm471, %v603, 0.0
        %668 = vadd.xlane.f32.xlu0 %v667
        %v669 = vpop.xlane.xlu0 %668
        %v670 = vsel %vm471, %v605, 0.0
        %671 = vadd.xlane.f32.xlu0 %v670
        %v672 = vpop.xlane.xlu0 %671
        %v673 = vsel %vm471, %v607, 0.0
        %674 = vadd.xlane.f32.xlu0 %v673
        %v675 = vpop.xlane.xlu0 %674
        %v676 = vsel %vm471, %v609, 0.0
        %677 = vadd.xlane.f32.xlu0 %v676
        %v678 = vpop.xlane.xlu0 %677
        %v679 = vsel %vm471, %v611, 0.0
        %680 = vadd.xlane.f32.xlu0 %v679
        %v681 = vpop.xlane.xlu0 %680
        %v682 = vsel %vm471, %v613, 0.0
        %683 = vadd.xlane.f32.xlu0 %v682
        %v684 = vpop.xlane.xlu0 %683
        %v685 = vsel %vm471, %v615, 0.0
        %686 = vadd.xlane.f32.xlu0 %v685
        %v687 = vpop.xlane.xlu0 %686
        %v688 = vsel %vm471, %v617, 0.0
        %689 = vadd.xlane.f32.xlu0 %v688
        %v690 = vpop.xlane.xlu0 %689
        %v691 = vsel %vm471, %v619, 0.0
        %692 = vadd.xlane.f32.xlu0 %v691
        %v693 = vpop.xlane.xlu0 %692
        %v694 = vsel %vm471, %v621, 0.0
        %695 = vadd.xlane.f32.xlu0 %v694
        %v696 = vpop.xlane.xlu0 %695
        %v697 = vsel %vm471, %v623, 0.0
        %698 = vadd.xlane.f32.xlu0 %v697
        %v699 = vpop.xlane.xlu0 %698
        %v700 = vsel %vm471, %v625, 0.0
        %701 = vadd.xlane.f32.xlu0 %v700
        %v702 = vpop.xlane.xlu0 %701
        %v703 = vsel %vm471, %v627, 0.0
        %704 = vadd.xlane.f32.xlu0 %v703
        %v705 = vpop.xlane.xlu0 %704
        %v706 = vsel %vm471, %v629, 0.0
        %707 = vadd.xlane.f32.xlu0 %v706
        %v708 = vpop.xlane.xlu0 %707
        %v709 = vsel %vm471, %v631, 0.0
        %710 = vadd.xlane.f32.xlu0 %v709
        %v711 = vpop.xlane.xlu0 %710
        %v712 = vsel %vm471, %v633, 0.0
        %713 = vadd.xlane.f32.xlu0 %v712
        %v714 = vpop.xlane.xlu0 %713
        %v715 = vsel %vm471, %v635, 0.0
        %716 = vadd.xlane.f32.xlu0 %v715
        %v717 = vpop.xlane.xlu0 %716
        %v718 = vsel %vm471, %v637, 0.0
        %719 = vadd.xlane.f32.xlu0 %v718
        %v720 = vpop.xlane.xlu0 %719
        %v721 = vsel %vm471, %v639, 0.0
        %722 = vadd.xlane.f32.xlu0 %v721
        %v723 = vpop.xlane.xlu0 %722
        %v724 = vsel %vm471, %v641, 0.0
        %725 = vadd.xlane.f32.xlu0 %v724
        %v726 = vpop.xlane.xlu0 %725
        %v727 = vsel %vm471, %v643, 0.0
        %728 = vadd.xlane.f32.xlu0 %v727
        %v729 = vpop.xlane.xlu0 %728
        %v730 = vsel %vm471, %v645, 0.0
        %731 = vadd.xlane.f32.xlu0 %v730
        %v732 = vpop.xlane.xlu0 %731
        %v733 = vsel %vm471, %v647, 0.0
        %734 = vadd.xlane.f32.xlu0 %v733
        %v735 = vpop.xlane.xlu0 %734
        %v736 = vsel %vm471, %v649, 0.0
        %737 = vadd.xlane.f32.xlu0 %v736
        %v738 = vpop.xlane.xlu0 %737
        %v739 = vsel %vm471, %v651, 0.0
        %740 = vadd.xlane.f32.xlu0 %v739
        %v741 = vpop.xlane.xlu0 %740
        %v742 = vsel %vm471, %v653, 0.0
        %743 = vadd.xlane.f32.xlu0 %v742
        %v744 = vpop.xlane.xlu0 %743
        %v745 = vsel %vm471, %v655, 0.0
        %746 = vadd.xlane.f32.xlu0 %v745
        %v747 = vpop.xlane.xlu0 %746
        %v748 = vsel %vm471, %v657, 0.0
        %749 = vadd.xlane.f32.xlu0 %v748
        %v750 = vpop.xlane.xlu0 %749
        %v751 = vsel %vm471, %v659, 0.0
        %752 = vadd.xlane.f32.xlu0 %v751
        %v753 = vpop.xlane.xlu0 %752
        %v754 = vsel %vm471, %v661, 0.0
        %755 = vadd.xlane.f32.xlu0 %v754
        %v756 = vpop.xlane.xlu0 %755
        %v757 = vsel %vm471, %v663, 0.0
        %758 = vadd.xlane.f32.xlu0 %v757
        %v759 = vpop.xlane.xlu0 %758
        %v760 = vlog2.pop %v666
        %v761 = vmul.f32 %v760, 0.6931472
        %v762 = vlog2.pop %v669
        %v763 = vmul.f32 %v762, 0.6931472
        %v764 = vlog2.pop %v672
        %v765 = vmul.f32 %v764, 0.6931472
        %v766 = vlog2.pop %v675
        %v767 = vmul.f32 %v766, 0.6931472
        %v768 = vlog2.pop %v678
        %v769 = vmul.f32 %v768, 0.6931472
        %v770 = vlog2.pop %v681
        %v771 = vmul.f32 %v770, 0.6931472
        %v772 = vlog2.pop %v684
        %v773 = vmul.f32 %v772, 0.6931472
        %v774 = vlog2.pop %v687
        %v775 = vmul.f32 %v774, 0.6931472
        %v776 = vlog2.pop %v690
        %v777 = vmul.f32 %v776, 0.6931472
        %v778 = vlog2.pop %v693
        %v779 = vmul.f32 %v778, 0.6931472
        %v780 = vlog2.pop %v696
        %v781 = vmul.f32 %v780, 0.6931472
        %v782 = vlog2.pop %v699
        %v783 = vmul.f32 %v782, 0.6931472
        %v784 = vlog2.pop %v702
        %v785 = vmul.f32 %v784, 0.6931472
        %v786 = vlog2.pop %v705
        %v787 = vmul.f32 %v786, 0.6931472
        %v788 = vlog2.pop %v708
        %v789 = vmul.f32 %v788, 0.6931472
        %v790 = vlog2.pop %v711
        %v791 = vmul.f32 %v790, 0.6931472
        %v792 = vlog2.pop %v714
        %v793 = vmul.f32 %v792, 0.6931472
        %v794 = vlog2.pop %v717
        %v795 = vmul.f32 %v794, 0.6931472
        %v796 = vlog2.pop %v720
        %v797 = vmul.f32 %v796, 0.6931472
        %v798 = vlog2.pop %v723
        %v799 = vmul.f32 %v798, 0.6931472
        %v800 = vlog2.pop %v726
        %v801 = vmul.f32 %v800, 0.6931472
        %v802 = vlog2.pop %v729
        %v803 = vmul.f32 %v802, 0.6931472
        %v804 = vlog2.pop %v732
        %v805 = vmul.f32 %v804, 0.6931472
        %v806 = vlog2.pop %v735
        %v807 = vmul.f32 %v806, 0.6931472
        %v808 = vlog2.pop %v738
        %v809 = vmul.f32 %v808, 0.6931472
        %v810 = vlog2.pop %v741
        %v811 = vmul.f32 %v810, 0.6931472
        %v812 = vlog2.pop %v744
        %v813 = vmul.f32 %v812, 0.6931472
        %v814 = vlog2.pop %v747
        %v815 = vmul.f32 %v814, 0.6931472
        %v816 = vlog2.pop %v750
        %v817 = vmul.f32 %v816, 0.6931472
        %v818 = vlog2.pop %v753
        %v819 = vmul.f32 %v818, 0.6931472
        %v820 = vlog2.pop %v756
        %v821 = vmul.f32 %v820, 0.6931472
        %v822 = vlog2.pop %v759
        %v823 = vmul.f32 %v822, 0.6931472
        %v824 = vadd.f32 %v761, %v474
        %v825 = vadd.f32 %v763, %v477
        %v826 = vadd.f32 %v765, %v480
        %v827 = vadd.f32 %v767, %v483
        %v828 = vadd.f32 %v769, %v486
        %v829 = vadd.f32 %v771, %v489
        %v830 = vadd.f32 %v773, %v492
        %v831 = vadd.f32 %v775, %v495
        %v832 = vadd.f32 %v777, %v498
        %v833 = vadd.f32 %v779, %v501
        %v834 = vadd.f32 %v781, %v504
        %v835 = vadd.f32 %v783, %v507
        %v836 = vadd.f32 %v785, %v510
        %v837 = vadd.f32 %v787, %v513
        %v838 = vadd.f32 %v789, %v516
        %v839 = vadd.f32 %v791, %v519
        %v840 = vadd.f32 %v793, %v522
        %v841 = vadd.f32 %v795, %v525
        %v842 = vadd.f32 %v797, %v528
        %v843 = vadd.f32 %v799, %v531
        %v844 = vadd.f32 %v801, %v534
        %v845 = vadd.f32 %v803, %v537
        %v846 = vadd.f32 %v805, %v540
        %v847 = vadd.f32 %v807, %v543
        %v848 = vadd.f32 %v809, %v546
        %v849 = vadd.f32 %v811, %v549
        %v850 = vadd.f32 %v813, %v552
        %v851 = vadd.f32 %v815, %v555
        %v852 = vadd.f32 %v817, %v558
        %v853 = vadd.f32 %v819, %v561
        %v854 = vadd.f32 %v821, %v564
        %v855 = vadd.f32 %v823, %v567
        %v856 = vlaneseq
        %v857 = vand.u32 %v856, 127
        %858 = vset.pattern.permute.xlu0 0
        %859 = vperm.xlu0 %858, %v276
        %v860 = vpop.permute.xlu0 %859
        %861 = vset.pattern.permute.xlu0 0
        %862 = vperm.xlu0 %861, %v277
        %v863 = vpop.permute.xlu0 %862
        %864 = vset.pattern.permute.xlu0 0
        %865 = vperm.xlu0 %864, %v278
        %v866 = vpop.permute.xlu0 %865
        %867 = vset.pattern.permute.xlu0 0
        %868 = vperm.xlu0 %867, %v279
        %v869 = vpop.permute.xlu0 %868
        %870 = vset.pattern.permute.xlu0 0
        %871 = vperm.xlu0 %870, %v280
        %v872 = vpop.permute.xlu0 %871
        %873 = vset.pattern.permute.xlu0 0
        %874 = vperm.xlu0 %873, %v281
        %v875 = vpop.permute.xlu0 %874
        %876 = vset.pattern.permute.xlu0 0
        %877 = vperm.xlu0 %876, %v282
        %v878 = vpop.permute.xlu0 %877
        %879 = vset.pattern.permute.xlu0 0
        %880 = vperm.xlu0 %879, %v283
        %v881 = vpop.permute.xlu0 %880
        %882 = vset.pattern.permute.xlu0 0
        %883 = vperm.xlu0 %882, %v284
        %v884 = vpop.permute.xlu0 %883
        %885 = vset.pattern.permute.xlu0 0
        %886 = vperm.xlu0 %885, %v285
        %v887 = vpop.permute.xlu0 %886
        %888 = vset.pattern.permute.xlu0 0
        %889 = vperm.xlu0 %888, %v286
        %v890 = vpop.permute.xlu0 %889
        %891 = vset.pattern.permute.xlu0 0
        %892 = vperm.xlu0 %891, %v287
        %v893 = vpop.permute.xlu0 %892
        %894 = vset.pattern.permute.xlu0 0
        %895 = vperm.xlu0 %894, %v288
        %v896 = vpop.permute.xlu0 %895
        %897 = vset.pattern.permute.xlu0 0
        %898 = vperm.xlu0 %897, %v289
        %v899 = vpop.permute.xlu0 %898
        %900 = vset.pattern.permute.xlu0 0
        %901 = vperm.xlu0 %900, %v290
        %v902 = vpop.permute.xlu0 %901
        %903 = vset.pattern.permute.xlu0 0
        %904 = vperm.xlu0 %903, %v291
        %v905 = vpop.permute.xlu0 %904
        %906 = vset.pattern.permute.xlu0 0
        %907 = vperm.xlu0 %906, %v292
        %v908 = vpop.permute.xlu0 %907
        %909 = vset.pattern.permute.xlu0 0
        %910 = vperm.xlu0 %909, %v293
        %v911 = vpop.permute.xlu0 %910
        %912 = vset.pattern.permute.xlu0 0
        %913 = vperm.xlu0 %912, %v294
        %v914 = vpop.permute.xlu0 %913
        %915 = vset.pattern.permute.xlu0 0
        %916 = vperm.xlu0 %915, %v295
        %v917 = vpop.permute.xlu0 %916
        %918 = vset.pattern.permute.xlu0 0
        %919 = vperm.xlu0 %918, %v296
        %v920 = vpop.permute.xlu0 %919
        %921 = vset.pattern.permute.xlu0 0
        %922 = vperm.xlu0 %921, %v297
        %v923 = vpop.permute.xlu0 %922
        %924 = vset.pattern.permute.xlu0 0
        %925 = vperm.xlu0 %924, %v298
        %v926 = vpop.permute.xlu0 %925
        %927 = vset.pattern.permute.xlu0 0
        %928 = vperm.xlu0 %927, %v299
        %v929 = vpop.permute.xlu0 %928
        %930 = vset.pattern.permute.xlu0 0
        %931 = vperm.xlu0 %930, %v300
        %v932 = vpop.permute.xlu0 %931
        %933 = vset.pattern.permute.xlu0 0
        %934 = vperm.xlu0 %933, %v301
        %v935 = vpop.permute.xlu0 %934
        %936 = vset.pattern.permute.xlu0 0
        %937 = vperm.xlu0 %936, %v302
        %v938 = vpop.permute.xlu0 %937
        %939 = vset.pattern.permute.xlu0 0
        %940 = vperm.xlu0 %939, %v303
        %v941 = vpop.permute.xlu0 %940
        %942 = vset.pattern.permute.xlu0 0
        %943 = vperm.xlu0 %942, %v304
        %v944 = vpop.permute.xlu0 %943
        %945 = vset.pattern.permute.xlu0 0
        %946 = vperm.xlu0 %945, %v305
        %v947 = vpop.permute.xlu0 %946
        %948 = vset.pattern.permute.xlu0 0
        %949 = vperm.xlu0 %948, %v306
        %v950 = vpop.permute.xlu0 %949
        %951 = vset.pattern.permute.xlu0 0
        %952 = vperm.xlu0 %951, %v307
        %v953 = vpop.permute.xlu0 %952
        %vm954 = vcmp.eq.s32.totalorder %v857, %v860
        %vm955 = vcmp.eq.s32.totalorder %v857, %v863
        %vm956 = vcmp.eq.s32.totalorder %v857, %v866
        %vm957 = vcmp.eq.s32.totalorder %v857, %v869
        %vm958 = vcmp.eq.s32.totalorder %v857, %v872
        %vm959 = vcmp.eq.s32.totalorder %v857, %v875
        %vm960 = vcmp.eq.s32.totalorder %v857, %v878
        %vm961 = vcmp.eq.s32.totalorder %v857, %v881
        %vm962 = vcmp.eq.s32.totalorder %v857, %v884
        %vm963 = vcmp.eq.s32.totalorder %v857, %v887
        %vm964 = vcmp.eq.s32.totalorder %v857, %v890
        %vm965 = vcmp.eq.s32.totalorder %v857, %v893
        %vm966 = vcmp.eq.s32.totalorder %v857, %v896
        %vm967 = vcmp.eq.s32.totalorder %v857, %v899
        %vm968 = vcmp.eq.s32.totalorder %v857, %v902
        %vm969 = vcmp.eq.s32.totalorder %v857, %v905
        %vm970 = vcmp.eq.s32.totalorder %v857, %v908
        %vm971 = vcmp.eq.s32.totalorder %v857, %v911
        %vm972 = vcmp.eq.s32.totalorder %v857, %v914
        %vm973 = vcmp.eq.s32.totalorder %v857, %v917
        %vm974 = vcmp.eq.s32.totalorder %v857, %v920
        %vm975 = vcmp.eq.s32.totalorder %v857, %v923
        %vm976 = vcmp.eq.s32.totalorder %v857, %v926
        %vm977 = vcmp.eq.s32.totalorder %v857, %v929
        %vm978 = vcmp.eq.s32.totalorder %v857, %v932
        %vm979 = vcmp.eq.s32.totalorder %v857, %v935
        %vm980 = vcmp.eq.s32.totalorder %v857, %v938
        %vm981 = vcmp.eq.s32.totalorder %v857, %v941
        %vm982 = vcmp.eq.s32.totalorder %v857, %v944
        %vm983 = vcmp.eq.s32.totalorder %v857, %v947
        %vm984 = vcmp.eq.s32.totalorder %v857, %v950
        %vm985 = vcmp.eq.s32.totalorder %v857, %v953
        %v986 = vsel %vm954, %v244, 0.0
        %v987 = vsel %vm955, %v245, 0.0
        %v988 = vsel %vm956, %v246, 0.0
        %v989 = vsel %vm957, %v247, 0.0
        %v990 = vsel %vm958, %v248, 0.0
        %v991 = vsel %vm959, %v249, 0.0
        %v992 = vsel %vm960, %v250, 0.0
        %v993 = vsel %vm961, %v251, 0.0
        %v994 = vsel %vm962, %v252, 0.0
        %v995 = vsel %vm963, %v253, 0.0
        %v996 = vsel %vm964, %v254, 0.0
        %v997 = vsel %vm965, %v255, 0.0
        %v998 = vsel %vm966, %v256, 0.0
        %v999 = vsel %vm967, %v257, 0.0
        %v1000 = vsel %vm968, %v258, 0.0
        %v1001 = vsel %vm969, %v259, 0.0
        %v1002 = vsel %vm970, %v260, 0.0
        %v1003 = vsel %vm971, %v261, 0.0
        %v1004 = vsel %vm972, %v262, 0.0
        %v1005 = vsel %vm973, %v263, 0.0
        %v1006 = vsel %vm974, %v264, 0.0
        %v1007 = vsel %vm975, %v265, 0.0
        %v1008 = vsel %vm976, %v266, 0.0
        %v1009 = vsel %vm977, %v267, 0.0
        %v1010 = vsel %vm978, %v268, 0.0
        %v1011 = vsel %vm979, %v269, 0.0
        %v1012 = vsel %vm980, %v270, 0.0
        %v1013 = vsel %vm981, %v271, 0.0
        %v1014 = vsel %vm982, %v272, 0.0
        %v1015 = vsel %vm983, %v273, 0.0
        %v1016 = vsel %vm984, %v274, 0.0
        %v1017 = vsel %vm985, %v275, 0.0
        %v1018 = vsel %vm471, %v986, 0.0
        %1019 = vadd.xlane.f32.xlu0 %v1018
        %v1020 = vpop.xlane.xlu0 %1019
        %v1021 = vsel %vm471, %v987, 0.0
        %1022 = vadd.xlane.f32.xlu0 %v1021
        %v1023 = vpop.xlane.xlu0 %1022
        %v1024 = vsel %vm471, %v988, 0.0
        %1025 = vadd.xlane.f32.xlu0 %v1024
        %v1026 = vpop.xlane.xlu0 %1025
        %v1027 = vsel %vm471, %v989, 0.0
        %1028 = vadd.xlane.f32.xlu0 %v1027
        %v1029 = vpop.xlane.xlu0 %1028
        %v1030 = vsel %vm471, %v990, 0.0
        %1031 = vadd.xlane.f32.xlu0 %v1030
        %v1032 = vpop.xlane.xlu0 %1031
        %v1033 = vsel %vm471, %v991, 0.0
        %1034 = vadd.xlane.f32.xlu0 %v1033
        %v1035 = vpop.xlane.xlu0 %1034
        %v1036 = vsel %vm471, %v992, 0.0
        %1037 = vadd.xlane.f32.xlu0 %v1036
        %v1038 = vpop.xlane.xlu0 %1037
        %v1039 = vsel %vm471, %v993, 0.0
        %1040 = vadd.xlane.f32.xlu0 %v1039
        %v1041 = vpop.xlane.xlu0 %1040
        %v1042 = vsel %vm471, %v994, 0.0
        %1043 = vadd.xlane.f32.xlu0 %v1042
        %v1044 = vpop.xlane.xlu0 %1043
        %v1045 = vsel %vm471, %v995, 0.0
        %1046 = vadd.xlane.f32.xlu0 %v1045
        %v1047 = vpop.xlane.xlu0 %1046
        %v1048 = vsel %vm471, %v996, 0.0
        %1049 = vadd.xlane.f32.xlu0 %v1048
        %v1050 = vpop.xlane.xlu0 %1049
        %v1051 = vsel %vm471, %v997, 0.0
        %1052 = vadd.xlane.f32.xlu0 %v1051
        %v1053 = vpop.xlane.xlu0 %1052
        %v1054 = vsel %vm471, %v998, 0.0
        %1055 = vadd.xlane.f32.xlu0 %v1054
        %v1056 = vpop.xlane.xlu0 %1055
        %v1057 = vsel %vm471, %v999, 0.0
        %1058 = vadd.xlane.f32.xlu0 %v1057
        %v1059 = vpop.xlane.xlu0 %1058
        %v1060 = vsel %vm471, %v1000, 0.0
        %1061 = vadd.xlane.f32.xlu0 %v1060
        %v1062 = vpop.xlane.xlu0 %1061
        %v1063 = vsel %vm471, %v1001, 0.0
        %1064 = vadd.xlane.f32.xlu0 %v1063
        %v1065 = vpop.xlane.xlu0 %1064
        %v1066 = vsel %vm471, %v1002, 0.0
        %1067 = vadd.xlane.f32.xlu0 %v1066
        %v1068 = vpop.xlane.xlu0 %1067
        %v1069 = vsel %vm471, %v1003, 0.0
        %1070 = vadd.xlane.f32.xlu0 %v1069
        %v1071 = vpop.xlane.xlu0 %1070
        %v1072 = vsel %vm471, %v1004, 0.0
        %1073 = vadd.xlane.f32.xlu0 %v1072
        %v1074 = vpop.xlane.xlu0 %1073
        %v1075 = vsel %vm471, %v1005, 0.0
        %1076 = vadd.xlane.f32.xlu0 %v1075
        %v1077 = vpop.xlane.xlu0 %1076
        %v1078 = vsel %vm471, %v1006, 0.0
        %1079 = vadd.xlane.f32.xlu0 %v1078
        %v1080 = vpop.xlane.xlu0 %1079
        %v1081 = vsel %vm471, %v1007, 0.0
        %1082 = vadd.xlane.f32.xlu0 %v1081
        %v1083 = vpop.xlane.xlu0 %1082
        %v1084 = vsel %vm471, %v1008, 0.0
        %1085 = vadd.xlane.f32.xlu0 %v1084
        %v1086 = vpop.xlane.xlu0 %1085
        %v1087 = vsel %vm471, %v1009, 0.0
        %1088 = vadd.xlane.f32.xlu0 %v1087
        %v1089 = vpop.xlane.xlu0 %1088
        %v1090 = vsel %vm471, %v1010, 0.0
        %1091 = vadd.xlane.f32.xlu0 %v1090
        %v1092 = vpop.xlane.xlu0 %1091
        %v1093 = vsel %vm471, %v1011, 0.0
        %1094 = vadd.xlane.f32.xlu0 %v1093
        %v1095 = vpop.xlane.xlu0 %1094
        %v1096 = vsel %vm471, %v1012, 0.0
        %1097 = vadd.xlane.f32.xlu0 %v1096
        %v1098 = vpop.xlane.xlu0 %1097
        %v1099 = vsel %vm471, %v1013, 0.0
        %1100 = vadd.xlane.f32.xlu0 %v1099
        %v1101 = vpop.xlane.xlu0 %1100
        %v1102 = vsel %vm471, %v1014, 0.0
        %1103 = vadd.xlane.f32.xlu0 %v1102
        %v1104 = vpop.xlane.xlu0 %1103
        %v1105 = vsel %vm471, %v1015, 0.0
        %1106 = vadd.xlane.f32.xlu0 %v1105
        %v1107 = vpop.xlane.xlu0 %1106
        %v1108 = vsel %vm471, %v1016, 0.0
        %1109 = vadd.xlane.f32.xlu0 %v1108
        %v1110 = vpop.xlane.xlu0 %1109
        %v1111 = vsel %vm471, %v1017, 0.0
        %1112 = vadd.xlane.f32.xlu0 %v1111
        %v1113 = vpop.xlane.xlu0 %1112
        %v1114 = vsub.f32 %v824, %v1020
        %v1115 = vsub.f32 %v825, %v1023
        %v1116 = vsub.f32 %v826, %v1026
        %v1117 = vsub.f32 %v827, %v1029
        %v1118 = vsub.f32 %v828, %v1032
        %v1119 = vsub.f32 %v829, %v1035
        %v1120 = vsub.f32 %v830, %v1038
        %v1121 = vsub.f32 %v831, %v1041
        %v1122 = vsub.f32 %v832, %v1044
        %v1123 = vsub.f32 %v833, %v1047
        %v1124 = vsub.f32 %v834, %v1050
        %v1125 = vsub.f32 %v835, %v1053
        %v1126 = vsub.f32 %v836, %v1056
        %v1127 = vsub.f32 %v837, %v1059
        %v1128 = vsub.f32 %v838, %v1062
        %v1129 = vsub.f32 %v839, %v1065
        %v1130 = vsub.f32 %v840, %v1068
        %v1131 = vsub.f32 %v841, %v1071
        %v1132 = vsub.f32 %v842, %v1074
        %v1133 = vsub.f32 %v843, %v1077
        %v1134 = vsub.f32 %v844, %v1080
        %v1135 = vsub.f32 %v845, %v1083
        %v1136 = vsub.f32 %v846, %v1086
        %v1137 = vsub.f32 %v847, %v1089
        %v1138 = vsub.f32 %v848, %v1092
        %v1139 = vsub.f32 %v849, %v1095
        %v1140 = vsub.f32 %v850, %v1098
        %v1141 = vsub.f32 %v851, %v1101
        %v1142 = vsub.f32 %v852, %v1104
        %v1143 = vsub.f32 %v853, %v1107
        %v1144 = vsub.f32 %v854, %v1110
        %v1145 = vsub.f32 %v855, %v1113
        %v1146 = vsel %vm439, %v1114, 0.0
        %v1147 = vsel %vm440, %v1115, 0.0
        %v1148 = vsel %vm441, %v1116, 0.0
        %v1149 = vsel %vm442, %v1117, 0.0
        %v1150 = vsel %vm443, %v1118, 0.0
        %v1151 = vsel %vm444, %v1119, 0.0
        %v1152 = vsel %vm445, %v1120, 0.0
        %v1153 = vsel %vm446, %v1121, 0.0
        %v1154 = vsel %vm447, %v1122, 0.0
        %v1155 = vsel %vm448, %v1123, 0.0
        %v1156 = vsel %vm449, %v1124, 0.0
        %v1157 = vsel %vm450, %v1125, 0.0
        %v1158 = vsel %vm451, %v1126, 0.0
        %v1159 = vsel %vm452, %v1127, 0.0
        %v1160 = vsel %vm453, %v1128, 0.0
        %v1161 = vsel %vm454, %v1129, 0.0
        %v1162 = vsel %vm455, %v1130, 0.0
        %v1163 = vsel %vm456, %v1131, 0.0
        %v1164 = vsel %vm457, %v1132, 0.0
        %v1165 = vsel %vm458, %v1133, 0.0
        %v1166 = vsel %vm459, %v1134, 0.0
        %v1167 = vsel %vm460, %v1135, 0.0
        %v1168 = vsel %vm461, %v1136, 0.0
        %v1169 = vsel %vm462, %v1137, 0.0
        %v1170 = vsel %vm463, %v1138, 0.0
        %v1171 = vsel %vm464, %v1139, 0.0
        %v1172 = vsel %vm465, %v1140, 0.0
        %v1173 = vsel %vm466, %v1141, 0.0
        %v1174 = vsel %vm467, %v1142, 0.0
        %v1175 = vsel %vm468, %v1143, 0.0
        %v1176 = vsel %vm469, %v1144, 0.0
        %v1177 = vsel %vm470, %v1145, 0.0
        %vm1178 = vcmask 7168
        %v1179 = vsel %vm1178, %v1146, 0.0
        %v1180 = vsel %vm1178, %v1147, 0.0
        %v1181 = vadd.f32 %v1179, %v1180
        %v1182 = vsel %vm1178, %v1148, 0.0
        %v1183 = vadd.f32 %v1181, %v1182
        %v1184 = vsel %vm1178, %v1149, 0.0
        %v1185 = vadd.f32 %v1183, %v1184
        %v1186 = vsel %vm1178, %v1150, 0.0
        %v1187 = vadd.f32 %v1185, %v1186
        %v1188 = vsel %vm1178, %v1151, 0.0
        %v1189 = vadd.f32 %v1187, %v1188
        %v1190 = vsel %vm1178, %v1152, 0.0
        %v1191 = vadd.f32 %v1189, %v1190
        %v1192 = vsel %vm1178, %v1153, 0.0
        %v1193 = vadd.f32 %v1191, %v1192
        %v1194 = vsel %vm1178, %v1154, 0.0
        %v1195 = vadd.f32 %v1193, %v1194
        %v1196 = vsel %vm1178, %v1155, 0.0
        %v1197 = vadd.f32 %v1195, %v1196
        %v1198 = vsel %vm1178, %v1156, 0.0
        %v1199 = vadd.f32 %v1197, %v1198
        %v1200 = vsel %vm1178, %v1157, 0.0
        %v1201 = vadd.f32 %v1199, %v1200
        %v1202 = vsel %vm1178, %v1158, 0.0
        %v1203 = vadd.f32 %v1201, %v1202
        %v1204 = vsel %vm1178, %v1159, 0.0
        %v1205 = vadd.f32 %v1203, %v1204
        %v1206 = vsel %vm1178, %v1160, 0.0
        %v1207 = vadd.f32 %v1205, %v1206
        %v1208 = vsel %vm1178, %v1161, 0.0
        %v1209 = vadd.f32 %v1207, %v1208
        %v1210 = vsel %vm1178, %v1162, 0.0
        %v1211 = vadd.f32 %v1209, %v1210
        %v1212 = vsel %vm1178, %v1163, 0.0
        %v1213 = vadd.f32 %v1211, %v1212
        %v1214 = vsel %vm1178, %v1164, 0.0
        %v1215 = vadd.f32 %v1213, %v1214
        %v1216 = vsel %vm1178, %v1165, 0.0
        %v1217 = vadd.f32 %v1215, %v1216
        %v1218 = vsel %vm1178, %v1166, 0.0
        %v1219 = vadd.f32 %v1217, %v1218
        %v1220 = vsel %vm1178, %v1167, 0.0
        %v1221 = vadd.f32 %v1219, %v1220
        %v1222 = vsel %vm1178, %v1168, 0.0
        %v1223 = vadd.f32 %v1221, %v1222
        %v1224 = vsel %vm1178, %v1169, 0.0
        %v1225 = vadd.f32 %v1223, %v1224
        %v1226 = vsel %vm1178, %v1170, 0.0
        %v1227 = vadd.f32 %v1225, %v1226
        %v1228 = vsel %vm1178, %v1171, 0.0
        %v1229 = vadd.f32 %v1227, %v1228
        %v1230 = vsel %vm1178, %v1172, 0.0
        %v1231 = vadd.f32 %v1229, %v1230
        %v1232 = vsel %vm1178, %v1173, 0.0
        %v1233 = vadd.f32 %v1231, %v1232
        %v1234 = vsel %vm1178, %v1174, 0.0
        %v1235 = vadd.f32 %v1233, %v1234
        %v1236 = vsel %vm1178, %v1175, 0.0
        %v1237 = vadd.f32 %v1235, %v1236
        %v1238 = vsel %vm1178, %v1176, 0.0
        %v1239 = vadd.f32 %v1237, %v1238
        %v1240 = vsel %vm1178, %v1177, 0.0
        %v1241 = vadd.f32 %v1239, %v1240
        %1242 = vadd.xlane.f32.xlu0 %v1241
        %v1243 = vpop.xlane.xlu0 %1242
        %v1244 = vrot.slane %v1243, 4
        %v1245 = vadd.f32 %v1243, %v1244
        %v1246 = vrot.slane %v1245, 2
        %v1247 = vadd.f32 %v1245, %v1246
        %v1248 = vrot.slane %v1247, 1
        %v1249 = vadd.f32 %v1247, %v1248
        %s1250 = vtos %v1249
        %v1251 = vsel %vm439, 1, 0
        %v1252 = vsel %vm440, 1, 0
        %v1253 = vsel %vm441, 1, 0
        %v1254 = vsel %vm442, 1, 0
        %v1255 = vsel %vm443, 1, 0
        %v1256 = vsel %vm444, 1, 0
        %v1257 = vsel %vm445, 1, 0
        %v1258 = vsel %vm446, 1, 0
        %v1259 = vsel %vm447, 1, 0
        %v1260 = vsel %vm448, 1, 0
        %v1261 = vsel %vm449, 1, 0
        %v1262 = vsel %vm450, 1, 0
        %v1263 = vsel %vm451, 1, 0
        %v1264 = vsel %vm452, 1, 0
        %v1265 = vsel %vm453, 1, 0
        %v1266 = vsel %vm454, 1, 0
        %v1267 = vsel %vm455, 1, 0
        %v1268 = vsel %vm456, 1, 0
        %v1269 = vsel %vm457, 1, 0
        %v1270 = vsel %vm458, 1, 0
        %v1271 = vsel %vm459, 1, 0
        %v1272 = vsel %vm460, 1, 0
        %v1273 = vsel %vm461, 1, 0
        %v1274 = vsel %vm462, 1, 0
        %v1275 = vsel %vm463, 1, 0
        %v1276 = vsel %vm464, 1, 0
        %v1277 = vsel %vm465, 1, 0
        %v1278 = vsel %vm466, 1, 0
        %v1279 = vsel %vm467, 1, 0
        %v1280 = vsel %vm468, 1, 0
        %v1281 = vsel %vm469, 1, 0
        %v1282 = vsel %vm470, 1, 0
        %v1283 = vcvt.s32.f32 %v1251
        %v1284 = vcvt.s32.f32 %v1252
        %v1285 = vcvt.s32.f32 %v1253
        %v1286 = vcvt.s32.f32 %v1254
        %v1287 = vcvt.s32.f32 %v1255
        %v1288 = vcvt.s32.f32 %v1256
        %v1289 = vcvt.s32.f32 %v1257
        %v1290 = vcvt.s32.f32 %v1258
        %v1291 = vcvt.s32.f32 %v1259
        %v1292 = vcvt.s32.f32 %v1260
        %v1293 = vcvt.s32.f32 %v1261
        %v1294 = vcvt.s32.f32 %v1262
        %v1295 = vcvt.s32.f32 %v1263
        %v1296 = vcvt.s32.f32 %v1264
        %v1297 = vcvt.s32.f32 %v1265
        %v1298 = vcvt.s32.f32 %v1266
        %v1299 = vcvt.s32.f32 %v1267
        %v1300 = vcvt.s32.f32 %v1268
        %v1301 = vcvt.s32.f32 %v1269
        %v1302 = vcvt.s32.f32 %v1270
        %v1303 = vcvt.s32.f32 %v1271
        %v1304 = vcvt.s32.f32 %v1272
        %v1305 = vcvt.s32.f32 %v1273
        %v1306 = vcvt.s32.f32 %v1274
        %v1307 = vcvt.s32.f32 %v1275
        %v1308 = vcvt.s32.f32 %v1276
        %v1309 = vcvt.s32.f32 %v1277
        %v1310 = vcvt.s32.f32 %v1278
        %v1311 = vcvt.s32.f32 %v1279
        %v1312 = vcvt.s32.f32 %v1280
        %v1313 = vcvt.s32.f32 %v1281
        %v1314 = vcvt.s32.f32 %v1282
        %v1315 = vsel %vm1178, %v1283, 0.0
        %v1316 = vsel %vm1178, %v1284, 0.0
        %v1317 = vadd.f32 %v1315, %v1316
        %v1318 = vsel %vm1178, %v1285, 0.0
        %v1319 = vadd.f32 %v1317, %v1318
        %v1320 = vsel %vm1178, %v1286, 0.0
        %v1321 = vadd.f32 %v1319, %v1320
        %v1322 = vsel %vm1178, %v1287, 0.0
        %v1323 = vadd.f32 %v1321, %v1322
        %v1324 = vsel %vm1178, %v1288, 0.0
        %v1325 = vadd.f32 %v1323, %v1324
        %v1326 = vsel %vm1178, %v1289, 0.0
        %v1327 = vadd.f32 %v1325, %v1326
        %v1328 = vsel %vm1178, %v1290, 0.0
        %v1329 = vadd.f32 %v1327, %v1328
        %v1330 = vsel %vm1178, %v1291, 0.0
        %v1331 = vadd.f32 %v1329, %v1330
        %v1332 = vsel %vm1178, %v1292, 0.0
        %v1333 = vadd.f32 %v1331, %v1332
        %v1334 = vsel %vm1178, %v1293, 0.0
        %v1335 = vadd.f32 %v1333, %v1334
        %v1336 = vsel %vm1178, %v1294, 0.0
        %v1337 = vadd.f32 %v1335, %v1336
        %v1338 = vsel %vm1178, %v1295, 0.0
        %v1339 = vadd.f32 %v1337, %v1338
        %v1340 = vsel %vm1178, %v1296, 0.0
        %v1341 = vadd.f32 %v1339, %v1340
        %v1342 = vsel %vm1178, %v1297, 0.0
        %v1343 = vadd.f32 %v1341, %v1342
        %v1344 = vsel %vm1178, %v1298, 0.0
        %v1345 = vadd.f32 %v1343, %v1344
        %v1346 = vsel %vm1178, %v1299, 0.0
        %v1347 = vadd.f32 %v1345, %v1346
        %v1348 = vsel %vm1178, %v1300, 0.0
        %v1349 = vadd.f32 %v1347, %v1348
        %v1350 = vsel %vm1178, %v1301, 0.0
        %v1351 = vadd.f32 %v1349, %v1350
        %v1352 = vsel %vm1178, %v1302, 0.0
        %v1353 = vadd.f32 %v1351, %v1352
        %v1354 = vsel %vm1178, %v1303, 0.0
        %v1355 = vadd.f32 %v1353, %v1354
        %v1356 = vsel %vm1178, %v1304, 0.0
        %v1357 = vadd.f32 %v1355, %v1356
        %v1358 = vsel %vm1178, %v1305, 0.0
        %v1359 = vadd.f32 %v1357, %v1358
        %v1360 = vsel %vm1178, %v1306, 0.0
        %v1361 = vadd.f32 %v1359, %v1360
        %v1362 = vsel %vm1178, %v1307, 0.0
        %v1363 = vadd.f32 %v1361, %v1362
        %v1364 = vsel %vm1178, %v1308, 0.0
        %v1365 = vadd.f32 %v1363, %v1364
        %v1366 = vsel %vm1178, %v1309, 0.0
        %v1367 = vadd.f32 %v1365, %v1366
        %v1368 = vsel %vm1178, %v1310, 0.0
        %v1369 = vadd.f32 %v1367, %v1368
        %v1370 = vsel %vm1178, %v1311, 0.0
        %v1371 = vadd.f32 %v1369, %v1370
        %v1372 = vsel %vm1178, %v1312, 0.0
        %v1373 = vadd.f32 %v1371, %v1372
        %v1374 = vsel %vm1178, %v1313, 0.0
        %v1375 = vadd.f32 %v1373, %v1374
        %v1376 = vsel %vm1178, %v1314, 0.0
        %v1377 = vadd.f32 %v1375, %v1376
        %1378 = vadd.xlane.f32.xlu0 %v1377
        %v1379 = vpop.xlane.xlu0 %1378
        %v1380 = vrot.slane %v1379, 4
        %v1381 = vadd.f32 %v1379, %v1380
        %v1382 = vrot.slane %v1381, 2
        %v1383 = vadd.f32 %v1381, %v1382
        %v1384 = vrot.slane %v1383, 1
        %v1385 = vadd.f32 %v1383, %v1384
        %s1386 = vtos %v1385
        %v1387 = vstv %s1250
        %1388 = vst [vmem:[%s208] sm:$0xff] %v1387
        %v1389 = vstv %s1386
        %1390 = vst [vmem:[%s215] sm:$0xff] %v1389
        %s1391 = sand.u32 %s81, 1
        %s1392 = scalar_lea.sflag [#allocation3], %s1391
        %s1393 = sand.u32 %s81, 1
        %s1394 = smul.addr %s1393, 8
        %s1395 = scalar_lea.vmem [#allocation2], %s1394
        %s1396 = sand.u32 %s107, 1
        %s1397 = scalar_lea.sflag [#allocation5], %s1396
        %s1398 = sand.u32 %s107, 1
        %s1399 = smul.addr %s1398, 8
        %s1400 = scalar_lea.vmem [#allocation4], %s1399
        // Predicated region
        $region29: #{tpu_custom_call.1} parent=27 // pred_check
          %p1401 = pneg %p91
        $region30: #{tpu_custom_call.1} parent=27 // pred_check_branch
          %1403 = sbr.rel (%p1401) target = $region32
        $region31: #{tpu_custom_call.1} parent=27 // pred_region
          %s1405 = ssub.s32 128, 128
          %1406 = vsyncadd %s1392, %s1405
          %s1407 = smul.addr %s21, 128
          %s1408 = scalar_lea.hbm %s2, %s1407
          %s1410 = sshll.u32 %s1395, 4
          %s1411 = int_to_ptr.vmem [resolvable:$true] %s1410
          %1413 = dma.vmem_to_hbm [thread:$0]  %s1411, 128, %s1408, %s1392
        $region32: #{tpu_custom_call.1} parent=27 // pred_fallthru
          _
        // Predicated region
        $region33: #{tpu_custom_call.1} parent=27 // pred_check
          %p1414 = pneg %p117
        $region34: #{tpu_custom_call.1} parent=27 // pred_check_branch
          %1416 = sbr.rel (%p1414) target = $region36
        $region35: #{tpu_custom_call.1} parent=27 // pred_region
          %s1418 = ssub.s32 128, 128
          %1419 = vsyncadd %s1397, %s1418
          %s1420 = smul.addr %s21, 128
          %s1421 = scalar_lea.hbm %s3, %s1420
          %s1423 = sshll.u32 %s1400, 4
          %s1424 = int_to_ptr.vmem [resolvable:$true] %s1423
          %1426 = dma.vmem_to_hbm [thread:$0]  %s1424, 128, %s1421, %s1397
        $region36: #{tpu_custom_call.1} parent=27 // pred_fallthru
          _
      $region28: #{tpu_custom_call.1} parent=5 // pred_fallthru
        _
      %p1427 = scmp.le.s32.totalorder 2, %s16
      // Predicated region
      $region37: #{tpu_custom_call.1} parent=5 // pred_check
        %p1428 = pneg %p1427
      $region38: #{tpu_custom_call.1} parent=5 // pred_check_branch
        %1430 = sbr.rel (%p1428) target = $region40
      $region39: #{tpu_custom_call.1} parent=5 // pred_region
        %s1431 = ssub.s32 %s16, 2
        // Predicated region
        $region41: #{tpu_custom_call.1} parent=39 // pred_check
          %p1432 = pneg %p97
        $region42: #{tpu_custom_call.1} parent=39 // pred_check_branch
          %1434 = sbr.rel (%p1432) target = $region44
        $region43: #{tpu_custom_call.1} parent=39 // pred_region
          %s1435 = sand.u32 %s82, 1
          %s1436 = scalar_lea.sflag [#allocation3], %s1435
          %s1437 = sand.u32 %s82, 1
          %s1438 = smul.addr %s1437, 8
          %s1439 = scalar_lea.vmem [#allocation2], %s1438
          %1440 = dma.done %s1436, 128
        $region44: #{tpu_custom_call.1} parent=39 // pred_fallthru
          _
        // Predicated region
        $region45: #{tpu_custom_call.1} parent=39 // pred_check
          %p1441 = pneg %p123
        $region46: #{tpu_custom_call.1} parent=39 // pred_check_branch
          %1443 = sbr.rel (%p1441) target = $region48
        $region47: #{tpu_custom_call.1} parent=39 // pred_region
          %s1444 = sand.u32 %s108, 1
          %s1445 = scalar_lea.sflag [#allocation5], %s1444
          %s1446 = sand.u32 %s108, 1
          %s1447 = smul.addr %s1446, 8
          %s1448 = scalar_lea.vmem [#allocation4], %s1447
          %1449 = dma.done %s1445, 128
        $region48: #{tpu_custom_call.1} parent=39 // pred_fallthru
          _
      $region40: #{tpu_custom_call.1} parent=5 // pred_fallthru
        _
    $region6: #{tpu_custom_call.1} parent=1 // loop_footer
      %s20 = sadd.s32 1, %s16
    $region7: #{tpu_custom_call.1} parent=1 // loop_footer_branch
      %15 = sbr.rel target = $region3
    $region8: #{tpu_custom_call.1} parent=1 // loop_exit
      _
    %1450 = vsyncpa [#allocation3], 1
    %s1451 = scalar_lea.sflag [#allocation3], 1
    %1452 = vsyncpa %s1451, 1
    %1453 = vsyncpa [#allocation5], 1
    %s1454 = scalar_lea.sflag [#allocation5], 1
    %1455 = vsyncpa %s1454, 1

</llo_original>
